<compile_context>
chip_gen: v7x
topology: tpu7x:2x2x1
jax: 0.10.0
libtpu: 0.0.40
codegen_flags: <defaults>
</compile_context>

<pallas_src>
import math
import functools

import jax
import jax.numpy as jnp
from jax.experimental import pallas as pl
from jax.experimental.pallas import tpu as pltpu


# --------------------------------------------------------------------------
# elementwise helper (used both in-kernel and in the XLA wrapper)
# --------------------------------------------------------------------------
def _mish(x):
    # x * tanh(softplus(x)), numerically stable softplus
    sp = jnp.maximum(x, 0.0) + jnp.log1p(jnp.exp(-jnp.abs(x)))
    return x * jnp.tanh(sp)


# --------------------------------------------------------------------------
# fused Denoiser kernel — grid = (batch, stack); one residual block per step
# --------------------------------------------------------------------------
def _denoiser_kernel(feat_ref, cond_ref, ds_ref,
                     w_pre_ref, b_pre_ref,                  # prenet       [F, D] bf16, [1, D] f32
                     w_cf_ref, w_cg_ref, b_cf_ref, b_cg_ref,  # condition  [1, C, D] x2, [1, 1, D] x2
                     w_kf_ref, w_kg_ref, b_kf_ref, b_kg_ref,  # K-tap conv [1, K, D, D] x2, [1, 1, D] x2
                     w_pr_ref, w_ps_ref, b_pr_ref, b_ps_ref,  # projection [1, D, D] x2, [1, 1, D] x2
                     w_p1_ref, b_p1_ref, w_p2_ref, b_p2_ref,  # output proj
                     out_ref,                                # [1, F, T]
                     x_scr, skips_scr, cond_scr,             # VMEM scratch
                     *, stack, kernel_size):
    s = pl.program_id(1)
    T, D = x_scr.shape
    K = kernel_size
    pad = K // 2
    bf16 = jnp.bfloat16

    # ---- per-batch init (first block only): layout fixup + prenet ----------
    @pl.when(s == 0)
    def _init():
        # native [F, T] -> [T, F]; small tile, XLU has slack
        feat = jnp.transpose(feat_ref[0]).astype(bf16)                  # [T, F]
        x0 = jnp.dot(feat, w_pre_ref[...],
                     preferred_element_type=jnp.float32) + b_pre_ref[...]
        x_scr[...] = _mish(x0)                                          # [T, D] f32
        skips_scr[...] = jnp.zeros_like(skips_scr)
        cond_scr[...] = jnp.transpose(cond_ref[0]).astype(cond_scr.dtype)  # [T, C] bf16

    x = x_scr[...]                                                      # [T, D] f32 (residual)
    cond = cond_scr[...]                                                # [T, C] bf16
    ds = ds_ref[0, 0]                                                   # [1, D] f32 (per-block step term)

    # ---- K-tap 'same' conv as K accumulated matmuls + condition 1x1 --------
    xin = x + ds                                                        # [T, D] f32
    if pad > 0:
        zpad = jnp.zeros((pad, D), jnp.float32)
        xpad = jnp.concatenate([zpad, xin, zpad], axis=0).astype(bf16)  # [T+2p, D]
    else:
        xpad = xin.astype(bf16)

    wf = w_kf_ref[0]                                                    # [K, D, D] bf16
    wg = w_kg_ref[0]
    acc_f = (b_kf_ref[0] + b_cf_ref[0]
             + jnp.dot(cond, w_cf_ref[0], preferred_element_type=jnp.float32))
    acc_g = (b_kg_ref[0] + b_cg_ref[0]
             + jnp.dot(cond, w_cg_ref[0], preferred_element_type=jnp.float32))
    for k in range(K):                                                  # tiny static loop
        tap = xpad[k:k + T]                                             # [T, D] bf16
        acc_f = acc_f + jnp.dot(tap, wf[k], preferred_element_type=jnp.float32)
        acc_g = acc_g + jnp.dot(tap, wg[k], preferred_element_type=jnp.float32)

    # ---- gated activation (f32 on VPU/EUP) ---------------------------------
    gated = (jax.nn.sigmoid(acc_f) * jnp.tanh(acc_g)).astype(bf16)      # [T, D]

    # ---- projection split into residual / skip (lane-aligned matmuls) ------
    res = jnp.dot(gated, w_pr_ref[0], preferred_element_type=jnp.float32) + b_pr_ref[0]
    skp = jnp.dot(gated, w_ps_ref[0], preferred_element_type=jnp.float32) + b_ps_ref[0]

    x_scr[...] = (x + res) * (1.0 / math.sqrt(2.0))
    skips_scr[...] = skips_scr[...] + skp

    # ---- last block: skip merge + output projection, lane-dense [F, T] -----
    @pl.when(s == stack - 1)
    def _final():
        y = skips_scr[...] * (1.0 / math.sqrt(stack))                   # [T, D] f32
        y = jnp.dot(y.astype(bf16), w_p1_ref[...],
                    preferred_element_type=jnp.float32) + b_p1_ref[...]
        y = jnp.maximum(y, 0.0)
        y = jnp.dot(y.astype(bf16), w_p2_ref[...],
                    preferred_element_type=jnp.float32) + b_p2_ref[...]  # [T, F]
        out_ref[0] = jnp.transpose(y).astype(out_ref.dtype)             # [F, T]


# --------------------------------------------------------------------------
# parameter init (PyTorch-style Conv1d init, stored channels-last and
# pre-split into filter/gate and residual/skip halves; weights bf16, biases f32)
# --------------------------------------------------------------------------
def _conv_w(key, cin, cout, k=1):
    kw, kb = jax.random.split(key)
    scale = 1.0 / math.sqrt(cin * k)
    shape = (cin, cout) if k == 1 else (k, cin, cout)
    w = scale * jax.random.normal(kw, shape, jnp.float32)
    b = scale * jax.random.normal(kb, (1, cout), jnp.float32)
    return w, b


def init_denoiser_params(key, feature_size, diff_size, enc_size,
                         kernel_size, stack):
    assert kernel_size % 2 == 1, "PyTorch 'same' semantics require odd kernel_size"
    D, Fd = diff_size, feature_size
    C = enc_size + feature_size
    bf16 = jnp.bfloat16
    keys = jax.random.split(key, 5 + stack)
    p = {"kernel_size": kernel_size}

    w, b = _conv_w(keys[0], Fd, D)
    p["prenet_w"], p["prenet_b"] = w.astype(bf16), b
    w, b = _conv_w(keys[1], D, 4 * D)
    p["step_w1"], p["step_b1"] = w, b              # step_ffn stays in XLA (f32)
    w, b = _conv_w(keys[2], 4 * D, D)
    p["step_w2"], p["step_b2"] = w, b
    w, b = _conv_w(keys[3], D, D)
    p["proj_w1"], p["proj_b1"] = w.astype(bf16), b
    # final projection: weight zero-initialized (torch.nn.init.zeros_), bias kept
    _, b = _conv_w(keys[4], D, Fd)
    p["proj_w2"], p["proj_b2"] = jnp.zeros((D, Fd), bf16), b

    cf, cg, cbf, cbg = [], [], [], []
    kf, kg, kbf, kbg = [], [], [], []
    pr, ps, pbr, pbs = [], [], [], []
    sw, sb = [], []
    for si in range(stack):
        bk = jax.random.split(keys[5 + si], 4)
        w, b = _conv_w(bk[0], C, 2 * D)                       # condition 1x1
        cf.append(w[:, :D]); cg.append(w[:, D:])
        cbf.append(b[:, :D]); cbg.append(b[:, D:])
        w, b = _conv_w(bk[1], D, D)                           # diffusion-step 1x1
        sw.append(w); sb.append(b)
        w, b = _conv_w(bk[2], D, 2 * D, k=kernel_size)        # K-tap conv  [K, D, 2D]
        kf.append(w[:, :, :D]); kg.append(w[:, :, D:])
        kbf.append(b[:, :D]); kbg.append(b[:, D:])
        w, b = _conv_w(bk[3], D, 2 * D)                       # projection 1x1
        pr.append(w[:, :D]); ps.append(w[:, D:])
        pbr.append(b[:, :D]); pbs.append(b[:, D:])

    p["blk_cond_wf"] = jnp.stack(cf).astype(bf16)   # [S, C, D]
    p["blk_cond_wg"] = jnp.stack(cg).astype(bf16)
    p["blk_cond_bf"] = jnp.stack(cbf)               # [S, 1, D] f32
    p["blk_cond_bg"] = jnp.stack(cbg)
    p["blk_conv_wf"] = jnp.stack(kf).astype(bf16)   # [S, K, D, D]
    p["blk_conv_wg"] = jnp.stack(kg).astype(bf16)
    p["blk_conv_bf"] = jnp.stack(kbf)
    p["blk_conv_bg"] = jnp.stack(kbg)
    p["blk_proj_wr"] = jnp.stack(pr).astype(bf16)   # [S, D, D]
    p["blk_proj_ws"] = jnp.stack(ps).astype(bf16)
    p["blk_proj_br"] = jnp.stack(pbr)
    p["blk_proj_bs"] = jnp.stack(pbs)
    # hoisted per-block diffusion-step convs (applied to ds in XLA): [D, S*D]
    p["blk_step_w"] = jnp.concatenate(sw, axis=1)
    p["blk_step_b"] = jnp.concatenate(sb, axis=1)
    return p


# --------------------------------------------------------------------------
# Denoiser forward
#   features:        [B, F, T]   (PyTorch NCT)
#   encodings:       [B, E+F, T]
#   diffusion_steps: [B]
#   returns:         [B, F, T]
# --------------------------------------------------------------------------
_WEIGHT_NAMES = ["prenet_w", "prenet_b",
                 "blk_cond_wf", "blk_cond_wg", "blk_cond_bf", "blk_cond_bg",
                 "blk_conv_wf", "blk_conv_wg", "blk_conv_bf", "blk_conv_bg",
                 "blk_proj_wr", "blk_proj_ws", "blk_proj_br", "blk_proj_bs",
                 "proj_w1", "proj_b1", "proj_w2", "proj_b2"]


def denoiser_forward(params, features, encodings, diffusion_steps):
    B, Fd, T = features.shape
    C = encodings.shape[1]
    D = params["prenet_b"].shape[1]
    S = params["blk_conv_wf"].shape[0]
    K = params["kernel_size"]

    # ---- sinusoidal step embedding + step_ffn + per-block step convs -------
    # (tiny [B, *] matmuls; cheaper in XLA and overlaps with the kernel)
    half = D // 2
    freq = math.log(10000.0) / (half - 1)
    pos = jnp.exp(jnp.arange(half, dtype=jnp.float32) * -freq)
    emb = diffusion_steps.astype(jnp.float32)[:, None] * pos[None, :]
    emb = jnp.concatenate([jnp.sin(emb), jnp.cos(emb)], axis=-1)        # [B, D]
    h = _mish(emb @ params["step_w1"] + params["step_b1"])              # [B, 4D]
    ds = h @ params["step_w2"] + params["step_b2"]                      # [B, D]
    ds_all = (ds @ params["blk_step_w"] + params["blk_step_b"])         # [B, S*D]
    ds_all = ds_all.reshape(B, S, 1, D)

    # ---- BlockSpecs ---------------------------------------------------------
    def const_spec(a):
        nd = a.ndim
        return pl.BlockSpec(a.shape, lambda b, s, _n=nd: (0,) * _n)

    def stream_spec(a):
        nd = a.ndim
        return pl.BlockSpec((1,) + a.shape[1:],
                            lambda b, s, _n=nd: (s,) + (0,) * (_n - 1))

    w_specs = [stream_spec(params[n]) if n.startswith("blk_") else const_spec(params[n])
               for n in _WEIGHT_NAMES]

    kernel = functools.partial(_denoiser_kernel, stack=S, kernel_size=K)
    out = pl.pallas_call(
        kernel,
        out_shape=jax.ShapeDtypeStruct((B, Fd, T), jnp.float32),
        grid=(B, S),                       # batch outer (parallel), stack inner (arbitrary)
        in_specs=[
            pl.BlockSpec((1, Fd, T), lambda b, s: (b, 0, 0)),    # features (native layout)
            pl.BlockSpec((1, C, T), lambda b, s: (b, 0, 0)),     # conditions (native layout)
            pl.BlockSpec((1, 1, 1, D), lambda b, s: (b, s, 0, 0)),  # per-block step term
        ] + w_specs,
        out_specs=pl.BlockSpec((1, Fd, T), lambda b, s: (b, 0, 0)),
        scratch_shapes=[
            pltpu.VMEM((T, D), jnp.float32),     # residual stream x
            pltpu.VMEM((T, D), jnp.float32),     # skip accumulator
            pltpu.VMEM((T, C), jnp.bfloat16),    # transposed conditions
        ],
        compiler_params=pltpu.CompilerParams(
            dimension_semantics=("parallel", "arbitrary"),
            vmem_limit_bytes=48 * 1024 * 1024),
    )(features, encodings, ds_all, *[params[n] for n in _WEIGHT_NAMES])

    return out                                    # already [B, F, T]


# --------------------------------------------------------------------------
if __name__ == "__main__":
    B, T = 2, 16
    FEATURE_SIZE = 16      # hp.Sound.Mel_Dim
    DIFF_SIZE = 32         # hp.Diffusion.Size
    ENC_SIZE = 16          # hp.Encoder.Size
    KERNEL_SIZE = 3        # hp.Diffusion.Kernel_Size
    STACK = 2              # hp.Diffusion.Stack

    key = jax.random.PRNGKey(0)
    k_par, k_feat, k_enc, k_step = jax.random.split(key, 4)

    params = init_denoiser_params(k_par, FEATURE_SIZE, DIFF_SIZE,
                                  ENC_SIZE, KERNEL_SIZE, STACK)

    features = jax.random.normal(k_feat, (B, FEATURE_SIZE, T), jnp.float32)
    encodings = jax.random.normal(k_enc, (B, ENC_SIZE + FEATURE_SIZE, T),
                                  jnp.float32)
    diffusion_steps = jax.random.randint(k_step, (B,), 0, 100).astype(jnp.float32)

    out = denoiser_forward(params, features, encodings, diffusion_steps)
    out = jax.block_until_ready(out)
    assert out.shape == (B, FEATURE_SIZE, T)
    assert jnp.all(jnp.isfinite(out))
    print("KERNEL_OK")
</pallas_src>

<mosaic_0001>
module attributes {stable_mosaic.version = 11 : i64} {
  func.func @_denoiser_kernel(%arg0: i32, %arg1: i32, %arg2: memref<1x16x16xf32, #tpu.memory_space<vmem>>, %arg3: memref<1x32x16xf32, #tpu.memory_space<vmem>>, %arg4: memref<1x1x1x32xf32, #tpu.memory_space<vmem>>, %arg5: memref<16x32xbf16, #tpu.memory_space<vmem>>, %arg6: memref<1x32xf32, #tpu.memory_space<vmem>>, %arg7: memref<1x32x32xbf16, #tpu.memory_space<vmem>>, %arg8: memref<1x32x32xbf16, #tpu.memory_space<vmem>>, %arg9: memref<1x1x32xf32, #tpu.memory_space<vmem>>, %arg10: memref<1x1x32xf32, #tpu.memory_space<vmem>>, %arg11: memref<1x3x32x32xbf16, #tpu.memory_space<vmem>>, %arg12: memref<1x3x32x32xbf16, #tpu.memory_space<vmem>>, %arg13: memref<1x1x32xf32, #tpu.memory_space<vmem>>, %arg14: memref<1x1x32xf32, #tpu.memory_space<vmem>>, %arg15: memref<1x32x32xbf16, #tpu.memory_space<vmem>>, %arg16: memref<1x32x32xbf16, #tpu.memory_space<vmem>>, %arg17: memref<1x1x32xf32, #tpu.memory_space<vmem>>, %arg18: memref<1x1x32xf32, #tpu.memory_space<vmem>>, %arg19: memref<32x32xbf16, #tpu.memory_space<vmem>>, %arg20: memref<1x32xf32, #tpu.memory_space<vmem>>, %arg21: memref<32x16xbf16, #tpu.memory_space<vmem>>, %arg22: memref<1x16xf32, #tpu.memory_space<vmem>>, %arg23: memref<1x16x16xf32, #tpu.memory_space<vmem>>, %arg24: memref<16x32xf32, #tpu.memory_space<vmem>>, %arg25: memref<16x32xf32, #tpu.memory_space<vmem>>, %arg26: memref<16x32xbf16, #tpu.memory_space<vmem>>) attributes {dimension_semantics = [#tpu.dimension_semantics<parallel>, #tpu.dimension_semantics<arbitrary>], iteration_bounds = array<i64: 2, 2>, scalar_prefetch = 0 : i64, scratch_operands = 3 : i64, tpu.core_type = #tpu.core_type<tc>, window_params = [{transform_indices = @transform_0, window_bounds = array<i64: 1, 16, 16>}, {transform_indices = @transform_1, window_bounds = array<i64: 1, 32, 16>}, {transform_indices = @transform_2, window_bounds = array<i64: 1, 1, 1, 32>}, {pipeline_mode = #tpu.pipeline_mode<synchronous>, transform_indices = @transform_3, window_bounds = array<i64: 16, 32>}, {pipeline_mode = #tpu.pipeline_mode<synchronous>, transform_indices = @transform_4, window_bounds = array<i64: 1, 32>}, {transform_indices = @transform_5, window_bounds = array<i64: 1, 32, 32>}, {transform_indices = @transform_6, window_bounds = array<i64: 1, 32, 32>}, {transform_indices = @transform_7, window_bounds = array<i64: 1, 1, 32>}, {transform_indices = @transform_8, window_bounds = array<i64: 1, 1, 32>}, {transform_indices = @transform_9, window_bounds = array<i64: 1, 3, 32, 32>}, {transform_indices = @transform_10, window_bounds = array<i64: 1, 3, 32, 32>}, {transform_indices = @transform_11, window_bounds = array<i64: 1, 1, 32>}, {transform_indices = @transform_12, window_bounds = array<i64: 1, 1, 32>}, {transform_indices = @transform_13, window_bounds = array<i64: 1, 32, 32>}, {transform_indices = @transform_14, window_bounds = array<i64: 1, 32, 32>}, {transform_indices = @transform_15, window_bounds = array<i64: 1, 1, 32>}, {transform_indices = @transform_16, window_bounds = array<i64: 1, 1, 32>}, {pipeline_mode = #tpu.pipeline_mode<synchronous>, transform_indices = @transform_17, window_bounds = array<i64: 32, 32>}, {pipeline_mode = #tpu.pipeline_mode<synchronous>, transform_indices = @transform_18, window_bounds = array<i64: 1, 32>}, {pipeline_mode = #tpu.pipeline_mode<synchronous>, transform_indices = @transform_19, window_bounds = array<i64: 32, 16>}, {pipeline_mode = #tpu.pipeline_mode<synchronous>, transform_indices = @transform_20, window_bounds = array<i64: 1, 16>}, {transform_indices = @transform_21, window_bounds = array<i64: 1, 16, 16>}]} {
    %c0_i32 = arith.constant 0 : i32
    %0 = arith.cmpi eq, %arg1, %c0_i32 : i32
    %1 = arith.extui %0 : i1 to i32
    %c0_i32_0 = arith.constant 0 : i32
    %2 = arith.cmpi ne, %1, %c0_i32_0 : i32
    scf.if %2 {
      %c0_65 = arith.constant 0 : index
      %c0_66 = arith.constant 0 : index
      %c0_67 = arith.constant 0 : index
      %95 = vector.load %arg2[%c0_65, %c0_66, %c0_67] : memref<1x16x16xf32, #tpu.memory_space<vmem>>, vector<1x16x16xf32>
      %96 = vector.shape_cast %95 : vector<1x16x16xf32> to vector<16x16xf32>
      %97 = tpu.transpose %96, [1, 0] : vector<16x16xf32> -> vector<16x16xf32>
      %98 = arith.truncf %97 : vector<16x16xf32> to vector<16x16xbf16>
      %c0_68 = arith.constant 0 : index
      %c0_69 = arith.constant 0 : index
      %99 = vector.load %arg5[%c0_68, %c0_69] : memref<16x32xbf16, #tpu.memory_space<vmem>>, vector<16x32xbf16>
      %cst_70 = arith.constant dense<0.000000e+00> : vector<16x32xf32>
      %100 = tpu.matmul %98, %99, %cst_70 {dimension_numbers = #tpu.dot_dimension_numbers<[1], [0], [0], [1], [0, 0, 1, 1], [], []>} : vector<16x16xbf16>, vector<16x32xbf16>, vector<16x32xf32> -> vector<16x32xf32>
      %c0_71 = arith.constant 0 : index
      %c0_72 = arith.constant 0 : index
      %101 = vector.load %arg6[%c0_71, %c0_72] : memref<1x32xf32, #tpu.memory_space<vmem>>, vector<1x32xf32>
      %102 = vector.broadcast %101 : vector<1x32xf32> to vector<16x32xf32>
      %103 = arith.addf %100, %102 : vector<16x32xf32>
      %cst_73 = arith.constant 0.000000e+00 : f32
      %104 = vector.broadcast %cst_73 : f32 to vector<16x32xf32>
      %105 = arith.maximumf %103, %104 : vector<16x32xf32>
      %106 = math.absf %103 : vector<16x32xf32>
      %cst_74 = arith.constant 0.000000e+00 : f32
      %107 = vector.broadcast %cst_74 : f32 to vector<16x32xf32>
      %108 = arith.subf %107, %106 : vector<16x32xf32>
      %109 = math.exp %108 : vector<16x32xf32>
      %110 = math.log1p %109 : vector<16x32xf32>
      %111 = arith.addf %105, %110 : vector<16x32xf32>
      %112 = math.tanh %111 : vector<16x32xf32>
      %113 = arith.mulf %103, %112 : vector<16x32xf32>
      %c0_75 = arith.constant 0 : index
      %c0_76 = arith.constant 0 : index
      %114 = vector.load %arg24[%c0_75, %c0_76] : memref<16x32xf32, #tpu.memory_space<vmem>>, vector<16x32xf32>
      tpu.vector_store %arg24[%c0_75, %c0_76], %113 {strides = array<i32>} : memref<16x32xf32, #tpu.memory_space<vmem>>, vector<16x32xf32>,
      %cst_77 = arith.constant 0.000000e+00 : f32
      %115 = vector.broadcast %cst_77 : f32 to vector<16x32xf32>
      %c0_78 = arith.constant 0 : index
      %c0_79 = arith.constant 0 : index
      %116 = vector.load %arg25[%c0_78, %c0_79] : memref<16x32xf32, #tpu.memory_space<vmem>>, vector<16x32xf32>
      tpu.vector_store %arg25[%c0_78, %c0_79], %115 {strides = array<i32>} : memref<16x32xf32, #tpu.memory_space<vmem>>, vector<16x32xf32>,
      %c0_80 = arith.constant 0 : index
      %c0_81 = arith.constant 0 : index
      %c0_82 = arith.constant 0 : index
      %117 = vector.load %arg3[%c0_80, %c0_81, %c0_82] : memref<1x32x16xf32, #tpu.memory_space<vmem>>, vector<1x32x16xf32>
      %118 = vector.shape_cast %117 : vector<1x32x16xf32> to vector<32x16xf32>
      %119 = tpu.transpose %118, [1, 0] : vector<32x16xf32> -> vector<16x32xf32>
      %120 = arith.truncf %119 : vector<16x32xf32> to vector<16x32xbf16>
      %c0_83 = arith.constant 0 : index
      %c0_84 = arith.constant 0 : index
      %121 = vector.load %arg26[%c0_83, %c0_84] : memref<16x32xbf16, #tpu.memory_space<vmem>>, vector<16x32xbf16>
      tpu.vector_store %arg26[%c0_83, %c0_84], %120 {strides = array<i32>} : memref<16x32xbf16, #tpu.memory_space<vmem>>, vector<16x32xbf16>,
    } else {
    }
    %c0 = arith.constant 0 : index
    %c0_1 = arith.constant 0 : index
    %3 = vector.load %arg24[%c0, %c0_1] : memref<16x32xf32, #tpu.memory_space<vmem>>, vector<16x32xf32>
    %c0_2 = arith.constant 0 : index
    %c0_3 = arith.constant 0 : index
    %4 = vector.load %arg26[%c0_2, %c0_3] : memref<16x32xbf16, #tpu.memory_space<vmem>>, vector<16x32xbf16>
    %c0_4 = arith.constant 0 : index
    %c0_5 = arith.constant 0 : index
    %c0_6 = arith.constant 0 : index
    %c0_7 = arith.constant 0 : index
    %5 = vector.load %arg4[%c0_4, %c0_5, %c0_6, %c0_7] : memref<1x1x1x32xf32, #tpu.memory_space<vmem>>, vector<1x1x1x32xf32>
    %6 = vector.shape_cast %5 : vector<1x1x1x32xf32> to vector<1x32xf32>
    %7 = vector.broadcast %6 : vector<1x32xf32> to vector<16x32xf32>
    %8 = arith.addf %3, %7 : vector<16x32xf32>
    %cst = arith.constant 0.000000e+00 : f32
    %9 = vector.broadcast %cst : f32 to vector<1x32xf32>
    %10 = tpu.concatenate %9, %8, %9 in 0 : vector<1x32xf32>, vector<16x32xf32>, vector<1x32xf32> -> vector<18x32xf32>
    %11 = arith.truncf %10 : vector<18x32xf32> to vector<18x32xbf16>
    %c0_8 = arith.constant 0 : index
    %c0_9 = arith.constant 0 : index
    %c0_10 = arith.constant 0 : index
    %c0_11 = arith.constant 0 : index
    %12 = vector.load %arg11[%c0_8, %c0_9, %c0_10, %c0_11] : memref<1x3x32x32xbf16, #tpu.memory_space<vmem>>, vector<1x3x32x32xbf16>
    %13 = vector.shape_cast %12 : vector<1x3x32x32xbf16> to vector<3x32x32xbf16>
    %c0_12 = arith.constant 0 : index
    %c0_13 = arith.constant 0 : index
    %c0_14 = arith.constant 0 : index
    %c0_15 = arith.constant 0 : index
    %14 = vector.load %arg12[%c0_12, %c0_13, %c0_14, %c0_15] : memref<1x3x32x32xbf16, #tpu.memory_space<vmem>>, vector<1x3x32x32xbf16>
    %15 = vector.shape_cast %14 : vector<1x3x32x32xbf16> to vector<3x32x32xbf16>
    %c0_16 = arith.constant 0 : index
    %c0_17 = arith.constant 0 : index
    %c0_18 = arith.constant 0 : index
    %16 = vector.load %arg13[%c0_16, %c0_17, %c0_18] : memref<1x1x32xf32, #tpu.memory_space<vmem>>, vector<1x1x32xf32>
    %17 = vector.shape_cast %16 : vector<1x1x32xf32> to vector<1x32xf32>
    %c0_19 = arith.constant 0 : index
    %c0_20 = arith.constant 0 : index
    %c0_21 = arith.constant 0 : index
    %18 = vector.load %arg9[%c0_19, %c0_20, %c0_21] : memref<1x1x32xf32, #tpu.memory_space<vmem>>, vector<1x1x32xf32>
    %19 = vector.shape_cast %18 : vector<1x1x32xf32> to vector<1x32xf32>
    %20 = arith.addf %17, %19 : vector<1x32xf32>
    %c0_22 = arith.constant 0 : index
    %c0_23 = arith.constant 0 : index
    %c0_24 = arith.constant 0 : index
    %21 = vector.load %arg7[%c0_22, %c0_23, %c0_24] : memref<1x32x32xbf16, #tpu.memory_space<vmem>>, vector<1x32x32xbf16>
    %22 = vector.shape_cast %21 : vector<1x32x32xbf16> to vector<32x32xbf16>
    %cst_25 = arith.constant dense<0.000000e+00> : vector<16x32xf32>
    %23 = tpu.matmul %4, %22, %cst_25 {dimension_numbers = #tpu.dot_dimension_numbers<[1], [0], [0], [1], [0, 0, 1, 1], [], []>} : vector<16x32xbf16>, vector<32x32xbf16>, vector<16x32xf32> -> vector<16x32xf32>
    %24 = vector.broadcast %20 : vector<1x32xf32> to vector<16x32xf32>
    %25 = arith.addf %24, %23 : vector<16x32xf32>
    %c0_26 = arith.constant 0 : index
    %c0_27 = arith.constant 0 : index
    %c0_28 = arith.constant 0 : index
    %26 = vector.load %arg14[%c0_26, %c0_27, %c0_28] : memref<1x1x32xf32, #tpu.memory_space<vmem>>, vector<1x1x32xf32>
    %27 = vector.shape_cast %26 : vector<1x1x32xf32> to vector<1x32xf32>
    %c0_29 = arith.constant 0 : index
    %c0_30 = arith.constant 0 : index
    %c0_31 = arith.constant 0 : index
    %28 = vector.load %arg10[%c0_29, %c0_30, %c0_31] : memref<1x1x32xf32, #tpu.memory_space<vmem>>, vector<1x1x32xf32>
    %29 = vector.shape_cast %28 : vector<1x1x32xf32> to vector<1x32xf32>
    %30 = arith.addf %27, %29 : vector<1x32xf32>
    %c0_32 = arith.constant 0 : index
    %c0_33 = arith.constant 0 : index
    %c0_34 = arith.constant 0 : index
    %31 = vector.load %arg8[%c0_32, %c0_33, %c0_34] : memref<1x32x32xbf16, #tpu.memory_space<vmem>>, vector<1x32x32xbf16>
    %32 = vector.shape_cast %31 : vector<1x32x32xbf16> to vector<32x32xbf16>
    %cst_35 = arith.constant dense<0.000000e+00> : vector<16x32xf32>
    %33 = tpu.matmul %4, %32, %cst_35 {dimension_numbers = #tpu.dot_dimension_numbers<[1], [0], [0], [1], [0, 0, 1, 1], [], []>} : vector<16x32xbf16>, vector<32x32xbf16>, vector<16x32xf32> -> vector<16x32xf32>
    %34 = vector.broadcast %30 : vector<1x32xf32> to vector<16x32xf32>
    %35 = arith.addf %34, %33 : vector<16x32xf32>
    %36 = vector.extract_strided_slice %11 {offsets = [0, 0], sizes = [16, 32], strides = [1, 1]} : vector<18x32xbf16> to vector<16x32xbf16>
    %37 = vector.extract_strided_slice %13 {offsets = [0, 0, 0], sizes = [1, 32, 32], strides = [1, 1, 1]} : vector<3x32x32xbf16> to vector<1x32x32xbf16>
    %38 = vector.shape_cast %37 : vector<1x32x32xbf16> to vector<32x32xbf16>
    %cst_36 = arith.constant dense<0.000000e+00> : vector<16x32xf32>
    %39 = tpu.matmul %36, %38, %cst_36 {dimension_numbers = #tpu.dot_dimension_numbers<[1], [0], [0], [1], [0, 0, 1, 1], [], []>} : vector<16x32xbf16>, vector<32x32xbf16>, vector<16x32xf32> -> vector<16x32xf32>
    %40 = arith.addf %25, %39 : vector<16x32xf32>
    %41 = vector.extract_strided_slice %15 {offsets = [0, 0, 0], sizes = [1, 32, 32], strides = [1, 1, 1]} : vector<3x32x32xbf16> to vector<1x32x32xbf16>
    %42 = vector.shape_cast %41 : vector<1x32x32xbf16> to vector<32x32xbf16>
    %cst_37 = arith.constant dense<0.000000e+00> : vector<16x32xf32>
    %43 = tpu.matmul %36, %42, %cst_37 {dimension_numbers = #tpu.dot_dimension_numbers<[1], [0], [0], [1], [0, 0, 1, 1], [], []>} : vector<16x32xbf16>, vector<32x32xbf16>, vector<16x32xf32> -> vector<16x32xf32>
    %44 = arith.addf %35, %43 : vector<16x32xf32>
    %45 = vector.extract_strided_slice %11 {offsets = [1, 0], sizes = [16, 32], strides = [1, 1]} : vector<18x32xbf16> to vector<16x32xbf16>
    %46 = vector.extract_strided_slice %13 {offsets = [1, 0, 0], sizes = [1, 32, 32], strides = [1, 1, 1]} : vector<3x32x32xbf16> to vector<1x32x32xbf16>
    %47 = vector.shape_cast %46 : vector<1x32x32xbf16> to vector<32x32xbf16>
    %cst_38 = arith.constant dense<0.000000e+00> : vector<16x32xf32>
    %48 = tpu.matmul %45, %47, %cst_38 {dimension_numbers = #tpu.dot_dimension_numbers<[1], [0], [0], [1], [0, 0, 1, 1], [], []>} : vector<16x32xbf16>, vector<32x32xbf16>, vector<16x32xf32> -> vector<16x32xf32>
    %49 = arith.addf %40, %48 : vector<16x32xf32>
    %50 = vector.extract_strided_slice %15 {offsets = [1, 0, 0], sizes = [1, 32, 32], strides = [1, 1, 1]} : vector<3x32x32xbf16> to vector<1x32x32xbf16>
    %51 = vector.shape_cast %50 : vector<1x32x32xbf16> to vector<32x32xbf16>
    %cst_39 = arith.constant dense<0.000000e+00> : vector<16x32xf32>
    %52 = tpu.matmul %45, %51, %cst_39 {dimension_numbers = #tpu.dot_dimension_numbers<[1], [0], [0], [1], [0, 0, 1, 1], [], []>} : vector<16x32xbf16>, vector<32x32xbf16>, vector<16x32xf32> -> vector<16x32xf32>
    %53 = arith.addf %44, %52 : vector<16x32xf32>
    %54 = vector.extract_strided_slice %11 {offsets = [2, 0], sizes = [16, 32], strides = [1, 1]} : vector<18x32xbf16> to vector<16x32xbf16>
    %55 = vector.extract_strided_slice %13 {offsets = [2, 0, 0], sizes = [1, 32, 32], strides = [1, 1, 1]} : vector<3x32x32xbf16> to vector<1x32x32xbf16>
    %56 = vector.shape_cast %55 : vector<1x32x32xbf16> to vector<32x32xbf16>
    %cst_40 = arith.constant dense<0.000000e+00> : vector<16x32xf32>
    %57 = tpu.matmul %54, %56, %cst_40 {dimension_numbers = #tpu.dot_dimension_numbers<[1], [0], [0], [1], [0, 0, 1, 1], [], []>} : vector<16x32xbf16>, vector<32x32xbf16>, vector<16x32xf32> -> vector<16x32xf32>
    %58 = arith.addf %49, %57 : vector<16x32xf32>
    %59 = vector.extract_strided_slice %15 {offsets = [2, 0, 0], sizes = [1, 32, 32], strides = [1, 1, 1]} : vector<3x32x32xbf16> to vector<1x32x32xbf16>
    %60 = vector.shape_cast %59 : vector<1x32x32xbf16> to vector<32x32xbf16>
    %cst_41 = arith.constant dense<0.000000e+00> : vector<16x32xf32>
    %61 = tpu.matmul %54, %60, %cst_41 {dimension_numbers = #tpu.dot_dimension_numbers<[1], [0], [0], [1], [0, 0, 1, 1], [], []>} : vector<16x32xbf16>, vector<32x32xbf16>, vector<16x32xf32> -> vector<16x32xf32>
    %62 = arith.addf %53, %61 : vector<16x32xf32>
    %63 = arith.negf %58 : vector<16x32xf32>
    %64 = math.exp %63 : vector<16x32xf32>
    %cst_42 = arith.constant 1.000000e+00 : f32
    %65 = vector.broadcast %cst_42 : f32 to vector<16x32xf32>
    %66 = arith.addf %65, %64 : vector<16x32xf32>
    %67 = arith.divf %65, %66 : vector<16x32xf32>
    %68 = math.tanh %62 : vector<16x32xf32>
    %69 = arith.mulf %67, %68 : vector<16x32xf32>
    %70 = arith.truncf %69 : vector<16x32xf32> to vector<16x32xbf16>
    %c0_43 = arith.constant 0 : index
    %c0_44 = arith.constant 0 : index
    %c0_45 = arith.constant 0 : index
    %71 = vector.load %arg15[%c0_43, %c0_44, %c0_45] : memref<1x32x32xbf16, #tpu.memory_space<vmem>>, vector<1x32x32xbf16>
    %72 = vector.shape_cast %71 : vector<1x32x32xbf16> to vector<32x32xbf16>
    %cst_46 = arith.constant dense<0.000000e+00> : vector<16x32xf32>
    %73 = tpu.matmul %70, %72, %cst_46 {dimension_numbers = #tpu.dot_dimension_numbers<[1], [0], [0], [1], [0, 0, 1, 1], [], []>} : vector<16x32xbf16>, vector<32x32xbf16>, vector<16x32xf32> -> vector<16x32xf32>
    %c0_47 = arith.constant 0 : index
    %c0_48 = arith.constant 0 : index
    %c0_49 = arith.constant 0 : index
    %74 = vector.load %arg17[%c0_47, %c0_48, %c0_49] : memref<1x1x32xf32, #tpu.memory_space<vmem>>, vector<1x1x32xf32>
    %75 = vector.shape_cast %74 : vector<1x1x32xf32> to vector<1x32xf32>
    %76 = vector.broadcast %75 : vector<1x32xf32> to vector<16x32xf32>
    %77 = arith.addf %73, %76 : vector<16x32xf32>
    %c0_50 = arith.constant 0 : index
    %c0_51 = arith.constant 0 : index
    %c0_52 = arith.constant 0 : index
    %78 = vector.load %arg16[%c0_50, %c0_51, %c0_52] : memref<1x32x32xbf16, #tpu.memory_space<vmem>>, vector<1x32x32xbf16>
    %79 = vector.shape_cast %78 : vector<1x32x32xbf16> to vector<32x32xbf16>
    %cst_53 = arith.constant dense<0.000000e+00> : vector<16x32xf32>
    %80 = tpu.matmul %70, %79, %cst_53 {dimension_numbers = #tpu.dot_dimension_numbers<[1], [0], [0], [1], [0, 0, 1, 1], [], []>} : vector<16x32xbf16>, vector<32x32xbf16>, vector<16x32xf32> -> vector<16x32xf32>
    %c0_54 = arith.constant 0 : index
    %c0_55 = arith.constant 0 : index
    %c0_56 = arith.constant 0 : index
    %81 = vector.load %arg18[%c0_54, %c0_55, %c0_56] : memref<1x1x32xf32, #tpu.memory_space<vmem>>, vector<1x1x32xf32>
    %82 = vector.shape_cast %81 : vector<1x1x32xf32> to vector<1x32xf32>
    %83 = vector.broadcast %82 : vector<1x32xf32> to vector<16x32xf32>
    %84 = arith.addf %80, %83 : vector<16x32xf32>
    %85 = arith.addf %3, %77 : vector<16x32xf32>
    %cst_57 = arith.constant 0.707106769 : f32
    %86 = vector.broadcast %cst_57 : f32 to vector<16x32xf32>
    %87 = arith.mulf %85, %86 : vector<16x32xf32>
    %c0_58 = arith.constant 0 : index
    %c0_59 = arith.constant 0 : index
    %88 = vector.load %arg24[%c0_58, %c0_59] : memref<16x32xf32, #tpu.memory_space<vmem>>, vector<16x32xf32>
    tpu.vector_store %arg24[%c0_58, %c0_59], %87 {strides = array<i32>} : memref<16x32xf32, #tpu.memory_space<vmem>>, vector<16x32xf32>,
    %c0_60 = arith.constant 0 : index
    %c0_61 = arith.constant 0 : index
    %89 = vector.load %arg25[%c0_60, %c0_61] : memref<16x32xf32, #tpu.memory_space<vmem>>, vector<16x32xf32>
    %90 = arith.addf %89, %84 : vector<16x32xf32>
    %c0_62 = arith.constant 0 : index
    %c0_63 = arith.constant 0 : index
    %91 = vector.load %arg25[%c0_62, %c0_63] : memref<16x32xf32, #tpu.memory_space<vmem>>, vector<16x32xf32>
    tpu.vector_store %arg25[%c0_62, %c0_63], %90 {strides = array<i32>} : memref<16x32xf32, #tpu.memory_space<vmem>>, vector<16x32xf32>,
    %c1_i32 = arith.constant 1 : i32
    %92 = arith.cmpi eq, %arg1, %c1_i32 : i32
    %93 = arith.extui %92 : i1 to i32
    %c0_i32_64 = arith.constant 0 : i32
    %94 = arith.cmpi ne, %93, %c0_i32_64 : i32
    scf.if %94 {
      %c0_65 = arith.constant 0 : index
      %c0_66 = arith.constant 0 : index
      %95 = vector.load %arg25[%c0_65, %c0_66] : memref<16x32xf32, #tpu.memory_space<vmem>>, vector<16x32xf32>
      %cst_67 = arith.constant 0.707106769 : f32
      %96 = vector.broadcast %cst_67 : f32 to vector<16x32xf32>
      %97 = arith.mulf %95, %96 : vector<16x32xf32>
      %98 = arith.truncf %97 : vector<16x32xf32> to vector<16x32xbf16>
      %c0_68 = arith.constant 0 : index
      %c0_69 = arith.constant 0 : index
      %99 = vector.load %arg19[%c0_68, %c0_69] : memref<32x32xbf16, #tpu.memory_space<vmem>>, vector<32x32xbf16>
      %cst_70 = arith.constant dense<0.000000e+00> : vector<16x32xf32>
      %100 = tpu.matmul %98, %99, %cst_70 {dimension_numbers = #tpu.dot_dimension_numbers<[1], [0], [0], [1], [0, 0, 1, 1], [], []>} : vector<16x32xbf16>, vector<32x32xbf16>, vector<16x32xf32> -> vector<16x32xf32>
      %c0_71 = arith.constant 0 : index
      %c0_72 = arith.constant 0 : index
      %101 = vector.load %arg20[%c0_71, %c0_72] : memref<1x32xf32, #tpu.memory_space<vmem>>, vector<1x32xf32>
      %102 = vector.broadcast %101 : vector<1x32xf32> to vector<16x32xf32>
      %103 = arith.addf %100, %102 : vector<16x32xf32>
      %cst_73 = arith.constant 0.000000e+00 : f32
      %104 = vector.broadcast %cst_73 : f32 to vector<16x32xf32>
      %105 = arith.maximumf %103, %104 : vector<16x32xf32>
      %106 = arith.truncf %105 : vector<16x32xf32> to vector<16x32xbf16>
      %c0_74 = arith.constant 0 : index
      %c0_75 = arith.constant 0 : index
      %107 = vector.load %arg21[%c0_74, %c0_75] : memref<32x16xbf16, #tpu.memory_space<vmem>>, vector<32x16xbf16>
      %cst_76 = arith.constant dense<0.000000e+00> : vector<16x16xf32>
      %108 = tpu.matmul %106, %107, %cst_76 {dimension_numbers = #tpu.dot_dimension_numbers<[1], [0], [0], [1], [0, 0, 1, 1], [], []>} : vector<16x32xbf16>, vector<32x16xbf16>, vector<16x16xf32> -> vector<16x16xf32>
      %c0_77 = arith.constant 0 : index
      %c0_78 = arith.constant 0 : index
      %109 = vector.load %arg22[%c0_77, %c0_78] : memref<1x16xf32, #tpu.memory_space<vmem>>, vector<1x16xf32>
      %110 = vector.broadcast %109 : vector<1x16xf32> to vector<16x16xf32>
      %111 = arith.addf %108, %110 : vector<16x16xf32>
      %112 = tpu.transpose %111, [1, 0] : vector<16x16xf32> -> vector<16x16xf32>
      %c0_79 = arith.constant 0 : index
      %c0_80 = arith.constant 0 : index
      %c0_81 = arith.constant 0 : index
      %113 = vector.load %arg23[%c0_79, %c0_80, %c0_81] : memref<1x16x16xf32, #tpu.memory_space<vmem>>, vector<1x16x16xf32>
      %114 = vector.shape_cast %113 : vector<1x16x16xf32> to vector<16x16xf32>
      %115 = vector.shape_cast %112 : vector<16x16xf32> to vector<1x16x16xf32>
      tpu.vector_store %arg23[%c0_79, %c0_80, %c0_81], %115 {strides = array<i32>} : memref<1x16x16xf32, #tpu.memory_space<vmem>>, vector<1x16x16xf32>,
    } else {
    }
    return
  }
  func.func @transform_0(%arg0: i32, %arg1: i32) -> (i32, i32, i32) {
    %c0_i32 = arith.constant 0 : i32
    %c0_i32_0 = arith.constant 0 : i32
    %c0_i32_1 = arith.constant 0 : i32
    return %arg0, %c0_i32, %c0_i32_0 : i32, i32, i32
  }
  func.func @transform_1(%arg0: i32, %arg1: i32) -> (i32, i32, i32) {
    %c0_i32 = arith.constant 0 : i32
    %c0_i32_0 = arith.constant 0 : i32
    %c0_i32_1 = arith.constant 0 : i32
    return %arg0, %c0_i32, %c0_i32_0 : i32, i32, i32
  }
  func.func @transform_2(%arg0: i32, %arg1: i32) -> (i32, i32, i32, i32) {
    %c0_i32 = arith.constant 0 : i32
    %c0_i32_0 = arith.constant 0 : i32
    %c0_i32_1 = arith.constant 0 : i32
    return %arg0, %arg1, %c0_i32, %c0_i32_0 : i32, i32, i32, i32
  }
  func.func @transform_3(%arg0: i32, %arg1: i32) -> (i32, i32) {
    %c0_i32 = arith.constant 0 : i32
    %c0_i32_0 = arith.constant 0 : i32
    %c0_i32_1 = arith.constant 0 : i32
    return %c0_i32, %c0_i32_0 : i32, i32
  }
  func.func @transform_4(%arg0: i32, %arg1: i32) -> (i32, i32) {
    %c0_i32 = arith.constant 0 : i32
    %c0_i32_0 = arith.constant 0 : i32
    %c0_i32_1 = arith.constant 0 : i32
    return %c0_i32, %c0_i32_0 : i32, i32
  }
  func.func @transform_5(%arg0: i32, %arg1: i32) -> (i32, i32, i32) {
    %c0_i32 = arith.constant 0 : i32
    %c0_i32_0 = arith.constant 0 : i32
    %c0_i32_1 = arith.constant 0 : i32
    return %arg1, %c0_i32, %c0_i32_0 : i32, i32, i32
  }
  func.func @transform_6(%arg0: i32, %arg1: i32) -> (i32, i32, i32) {
    %c0_i32 = arith.constant 0 : i32
    %c0_i32_0 = arith.constant 0 : i32
    %c0_i32_1 = arith.constant 0 : i32
    return %arg1, %c0_i32, %c0_i32_0 : i32, i32, i32
  }
  func.func @transform_7(%arg0: i32, %arg1: i32) -> (i32, i32, i32) {
    %c0_i32 = arith.constant 0 : i32
    %c0_i32_0 = arith.constant 0 : i32
    %c0_i32_1 = arith.constant 0 : i32
    return %arg1, %c0_i32, %c0_i32_0 : i32, i32, i32
  }
  func.func @transform_8(%arg0: i32, %arg1: i32) -> (i32, i32, i32) {
    %c0_i32 = arith.constant 0 : i32
    %c0_i32_0 = arith.constant 0 : i32
    %c0_i32_1 = arith.constant 0 : i32
    return %arg1, %c0_i32, %c0_i32_0 : i32, i32, i32
  }
  func.func @transform_9(%arg0: i32, %arg1: i32) -> (i32, i32, i32, i32) {
    %c0_i32 = arith.constant 0 : i32
    %c0_i32_0 = arith.constant 0 : i32
    %c0_i32_1 = arith.constant 0 : i32
    %c0_i32_2 = arith.constant 0 : i32
    return %arg1, %c0_i32, %c0_i32_0, %c0_i32_1 : i32, i32, i32, i32
  }
  func.func @transform_10(%arg0: i32, %arg1: i32) -> (i32, i32, i32, i32) {
    %c0_i32 = arith.constant 0 : i32
    %c0_i32_0 = arith.constant 0 : i32
    %c0_i32_1 = arith.constant 0 : i32
    %c0_i32_2 = arith.constant 0 : i32
    return %arg1, %c0_i32, %c0_i32_0, %c0_i32_1 : i32, i32, i32, i32
  }
  func.func @transform_11(%arg0: i32, %arg1: i32) -> (i32, i32, i32) {
    %c0_i32 = arith.constant 0 : i32
    %c0_i32_0 = arith.constant 0 : i32
    %c0_i32_1 = arith.constant 0 : i32
    return %arg1, %c0_i32, %c0_i32_0 : i32, i32, i32
  }
  func.func @transform_12(%arg0: i32, %arg1: i32) -> (i32, i32, i32) {
    %c0_i32 = arith.constant 0 : i32
    %c0_i32_0 = arith.constant 0 : i32
    %c0_i32_1 = arith.constant 0 : i32
    return %arg1, %c0_i32, %c0_i32_0 : i32, i32, i32
  }
  func.func @transform_13(%arg0: i32, %arg1: i32) -> (i32, i32, i32) {
    %c0_i32 = arith.constant 0 : i32
    %c0_i32_0 = arith.constant 0 : i32
    %c0_i32_1 = arith.constant 0 : i32
    return %arg1, %c0_i32, %c0_i32_0 : i32, i32, i32
  }
  func.func @transform_14(%arg0: i32, %arg1: i32) -> (i32, i32, i32) {
    %c0_i32 = arith.constant 0 : i32
    %c0_i32_0 = arith.constant 0 : i32
    %c0_i32_1 = arith.constant 0 : i32
    return %arg1, %c0_i32, %c0_i32_0 : i32, i32, i32
  }
  func.func @transform_15(%arg0: i32, %arg1: i32) -> (i32, i32, i32) {
    %c0_i32 = arith.constant 0 : i32
    %c0_i32_0 = arith.constant 0 : i32
    %c0_i32_1 = arith.constant 0 : i32
    return %arg1, %c0_i32, %c0_i32_0 : i32, i32, i32
  }
  func.func @transform_16(%arg0: i32, %arg1: i32) -> (i32, i32, i32) {
    %c0_i32 = arith.constant 0 : i32
    %c0_i32_0 = arith.constant 0 : i32
    %c0_i32_1 = arith.constant 0 : i32
    return %arg1, %c0_i32, %c0_i32_0 : i32, i32, i32
  }
  func.func @transform_17(%arg0: i32, %arg1: i32) -> (i32, i32) {
    %c0_i32 = arith.constant 0 : i32
    %c0_i32_0 = arith.constant 0 : i32
    %c0_i32_1 = arith.constant 0 : i32
    return %c0_i32, %c0_i32_0 : i32, i32
  }
  func.func @transform_18(%arg0: i32, %arg1: i32) -> (i32, i32) {
    %c0_i32 = arith.constant 0 : i32
    %c0_i32_0 = arith.constant 0 : i32
    %c0_i32_1 = arith.constant 0 : i32
    return %c0_i32, %c0_i32_0 : i32, i32
  }
  func.func @transform_19(%arg0: i32, %arg1: i32) -> (i32, i32) {
    %c0_i32 = arith.constant 0 : i32
    %c0_i32_0 = arith.constant 0 : i32
    %c0_i32_1 = arith.constant 0 : i32
    return %c0_i32, %c0_i32_0 : i32, i32
  }
  func.func @transform_20(%arg0: i32, %arg1: i32) -> (i32, i32) {
    %c0_i32 = arith.constant 0 : i32
    %c0_i32_0 = arith.constant 0 : i32
    %c0_i32_1 = arith.constant 0 : i32
    return %c0_i32, %c0_i32_0 : i32, i32
  }
  func.func @transform_21(%arg0: i32, %arg1: i32) -> (i32, i32, i32) {
    %c0_i32 = arith.constant 0 : i32
    %c0_i32_0 = arith.constant 0 : i32
    %c0_i32_1 = arith.constant 0 : i32
    return %arg0, %c0_i32, %c0_i32_0 : i32, i32, i32
  }
}

</mosaic_0001>

<llo_original>
// kernel: tpu_custom_call.1
$region0: #{tpu_custom_call.1}
  #allocation0 [shape = 'u32[]', space=smem, size = 0x4, offset = 0x4, fixed_abs, tag = 'smem constant byte address 0x4 - core index']
  #allocation1 [shape = 'u32[144,128]{1,0:T(1,128)}', space=vmem, size = 0x12000, scoped, tag = 'internal scratch']
  #allocation2 [shape = 'f32[16,32]{1,0:T(8,128)}', space=vmem, size = 0x2000, scoped, tag = 'scratch operand']
  #allocation3 [shape = 'f32[16,32]{1,0:T(8,128)}', space=vmem, size = 0x2000, scoped, tag = 'scratch operand']
  #allocation4 [shape = 'bf16[16,32]{1,0:T(16,128)(2,1)}', space=vmem, size = 0x1000, scoped, tag = 'scratch operand']
  %s0 = inlined_call_operand.vmem [shape: f32[2,16,16], index: 0, kind: input, shape index: {}]
  %s1 = inlined_call_operand.vmem [shape: f32[2,32,16], index: 1, kind: input, shape index: {}]
  %s2 = inlined_call_operand.hbm [shape: f32[2,2,1,32], index: 2, kind: input, shape index: {}]
  %s3 = inlined_call_operand.hbm [shape: bf16[16,32], index: 3, kind: input, shape index: {}]
  %s4 = inlined_call_operand.hbm [shape: f32[1,32], index: 4, kind: input, shape index: {}]
  %s5 = inlined_call_operand.hbm [shape: bf16[2,32,32], index: 5, kind: input, shape index: {}]
  %s6 = inlined_call_operand.hbm [shape: bf16[2,32,32], index: 6, kind: input, shape index: {}]
  %s7 = inlined_call_operand.hbm [shape: f32[2,1,32], index: 7, kind: input, shape index: {}]
  %s8 = inlined_call_operand.hbm [shape: f32[2,1,32], index: 8, kind: input, shape index: {}]
  %s9 = inlined_call_operand.vmem [shape: bf16[2,3,32,32], index: 9, kind: input, shape index: {}]
  %s10 = inlined_call_operand.hbm [shape: bf16[2,3,32,32], index: 10, kind: input, shape index: {}]
  %s11 = inlined_call_operand.hbm [shape: f32[2,1,32], index: 11, kind: input, shape index: {}]
  %s12 = inlined_call_operand.hbm [shape: f32[2,1,32], index: 12, kind: input, shape index: {}]
  %s13 = inlined_call_operand.vmem [shape: bf16[2,32,32], index: 13, kind: input, shape index: {}]
  %s14 = inlined_call_operand.hbm [shape: bf16[2,32,32], index: 14, kind: input, shape index: {}]
  %s15 = inlined_call_operand.hbm [shape: f32[2,1,32], index: 15, kind: input, shape index: {}]
  %s16 = inlined_call_operand.hbm [shape: f32[2,1,32], index: 16, kind: input, shape index: {}]
  %s17 = inlined_call_operand.vmem [shape: bf16[32,32], index: 17, kind: input, shape index: {}]
  %s18 = inlined_call_operand.vmem [shape: f32[1,32], index: 18, kind: input, shape index: {}]
  %s19 = inlined_call_operand.vmem [shape: bf16[32,16], index: 19, kind: input, shape index: {}]
  %s20 = inlined_call_operand.vmem [shape: f32[1,16], index: 20, kind: input, shape index: {}]
  %s21 = inlined_call_operand.hbm [shape: f32[2,16,16], index: 21, kind: output, shape index: {}]
  %s22 = sld [smem:[#allocation0]]
  $region177: #{tpu_custom_call.1} parent=0
    _
  %s24 = ssub.s32 1, %s22
  %s25 = scalar_select 0, %s24, %s22
  $region1: #{tpu_custom_call.1} parent=0
    #allocation5 [shape = 'u8[1024]{0}', space=vmem, size = 0x400, scoped, tag = 'input window, operand 2']
    #allocation6 [shape = 's32[2]{0}', space=sflag, size = 0x8, scoped, tag = 'scoped memory for tpu_custom_call.1']
    #allocation7 [shape = 's32[2]{0}', space=sflag, size = 0x8, scoped, tag = 'scoped memory for tpu_custom_call.1']
    #allocation8 [shape = 'u8[4096]{0}', space=vmem, size = 0x1000, scoped, tag = 'input window, operand 3, single buffered']
    #allocation9 [shape = 's32[1]{0}', space=sflag, size = 0x4, scoped, tag = 'scoped memory for tpu_custom_call.1']
    #allocation10 [shape = 'u8[512]{0}', space=vmem, size = 0x400, scoped, tag = 'input window, operand 4, single buffered']
    #allocation11 [shape = 'u8[16384]{0}', space=vmem, size = 0x4000, scoped, tag = 'input window, operand 5']
    #allocation12 [shape = 's32[2]{0}', space=sflag, size = 0x8, scoped, tag = 'scoped memory for tpu_custom_call.1']
    #allocation13 [shape = 'u8[16384]{0}', space=vmem, size = 0x4000, scoped, tag = 'input window, operand 6']
    #allocation14 [shape = 'u8[1024]{0}', space=vmem, size = 0x400, scoped, tag = 'input window, operand 7']
    #allocation15 [shape = 's32[2]{0}', space=sflag, size = 0x8, scoped, tag = 'scoped memory for tpu_custom_call.1']
    #allocation16 [shape = 'u8[1024]{0}', space=vmem, size = 0x400, scoped, tag = 'input window, operand 8']
    #allocation17 [shape = 'u8[49152]{0}', space=vmem, size = 0xc000, scoped, tag = 'input window, operand 10']
    #allocation18 [shape = 's32[2]{0}', space=sflag, size = 0x8, scoped, tag = 'scoped memory for tpu_custom_call.1']
    #allocation19 [shape = 'u8[1024]{0}', space=vmem, size = 0x400, scoped, tag = 'input window, operand 11']
    #allocation20 [shape = 'u8[1024]{0}', space=vmem, size = 0x400, scoped, tag = 'input window, operand 12']
    #allocation21 [shape = 's32[2]{0}', space=sflag, size = 0x8, scoped, tag = 'scoped memory for tpu_custom_call.1']
    #allocation22 [shape = 'u8[16384]{0}', space=vmem, size = 0x4000, scoped, tag = 'input window, operand 14']
    #allocation23 [shape = 'u8[1024]{0}', space=vmem, size = 0x400, scoped, tag = 'input window, operand 15']
    #allocation24 [shape = 's32[2]{0}', space=sflag, size = 0x8, scoped, tag = 'scoped memory for tpu_custom_call.1']
    #allocation25 [shape = 'u8[1024]{0}', space=vmem, size = 0x400, scoped, tag = 'input window, operand 16']
    #allocation26 [shape = 'u8[16384]{0}', space=vmem, size = 0x4000, scoped, tag = 'output window, operand 0']
    %26 = vsyncpa [#allocation6], 0
    %s27 = scalar_lea.sflag [#allocation6], 1
    %28 = vsyncpa %s27, 0
    %29 = vsyncpa [#allocation9], 0
    %30 = vsyncpa [#allocation12], 0
    %s31 = scalar_lea.sflag [#allocation12], 1
    %32 = vsyncpa %s31, 0
    %33 = vsyncpa [#allocation15], 0
    %s34 = scalar_lea.sflag [#allocation15], 1
    %35 = vsyncpa %s34, 0
    %36 = vsyncpa [#allocation18], 0
    %s37 = scalar_lea.sflag [#allocation18], 1
    %38 = vsyncpa %s37, 0
    %39 = vsyncpa [#allocation21], 0
    %s40 = scalar_lea.sflag [#allocation21], 1
    %41 = vsyncpa %s40, 0
    %42 = vsyncpa [#allocation24], 0
    %s43 = scalar_lea.sflag [#allocation24], 1
    %44 = vsyncpa %s43, 0
    %45 = vsyncpa [#allocation7], 0
    %s46 = scalar_lea.sflag [#allocation7], 1
    %47 = vsyncpa %s46, 0
    loop: start=0, step=1, limit=6
    $region2: #{tpu_custom_call.1} parent=1 // loop_pre_header
      _
    $region3: #{tpu_custom_call.1} parent=1 // loop_header
      %s49 = sphi 0, %s53
      %p50 = scmp.ge.s32.totalorder %s49, 6
      %s56 = sphi 0, %s68
      %s57 = sphi 0, %s64
      %s58 = sphi 0, %s56
      %s59 = sphi 0, %s57
      %s60 = sphi 0, %s58
      %s61 = sphi 0, %s59
      %s71 = sphi 0, %s73
      %s74 = sphi 0, %s71
      %s75 = sphi 0, %s74
      %s91 = sphi 0, %s75
      %s97 = sphi 0, %s99
      %s100 = sphi 0, %s97
      %s101 = sphi 0, %s100
      %s117 = sphi 0, %s101
      %s125 = sphi 0, %s127
      %s128 = sphi 0, %s125
      %s129 = sphi 0, %s128
      %s145 = sphi 0, %s129
      %s149 = sphi 0, %s149
      %s151 = sphi 0, %s149
      %s152 = sphi 0, %s151
      %s166 = sphi 0, %s152
      %s170 = sphi 0, %s170
      %s172 = sphi 0, %s170
      %s173 = sphi 0, %s172
      %s187 = sphi 0, %s173
      %s193 = sphi 0, %s195
      %s196 = sphi 0, %s193
      %s197 = sphi 0, %s196
      %s213 = sphi 0, %s197
      %s219 = sphi 0, %s221
      %s222 = sphi 0, %s219
      %s223 = sphi 0, %s222
      %s239 = sphi 0, %s223
      %s245 = sphi 0, %s247
      %s248 = sphi 0, %s245
      %s249 = sphi 0, %s248
      %s265 = sphi 0, %s249
      %s271 = sphi 0, %s273
      %s274 = sphi 0, %s271
      %s275 = sphi 0, %s274
      %s291 = sphi 0, %s275
      %s297 = sphi 0, %s299
      %s300 = sphi 0, %s297
      %s301 = sphi 0, %s300
      %s317 = sphi 0, %s301
      %s323 = sphi 0, %s325
      %s326 = sphi 0, %s323
      %s327 = sphi 0, %s326
      %s343 = sphi 0, %s327
      %s349 = sphi 0, %s351
      %s352 = sphi 0, %s349
      %s353 = sphi 0, %s352
      %s369 = sphi 0, %s353
      %s375 = sphi 0, %s377
      %s378 = sphi 0, %s375
      %s379 = sphi 0, %s378
      %s395 = sphi 0, %s379
      %s401 = sphi 0, %s403
      %s404 = sphi 0, %s401
      %s405 = sphi 0, %s404
      %s421 = sphi 0, %s405
      %s427 = sphi 0, %s429
      %s430 = sphi 0, %s427
      %s431 = sphi 0, %s430
      %s447 = sphi 0, %s431
      %s453 = sphi 0, %s455
      %s456 = sphi 0, %s453
      %s457 = sphi 0, %s456
      %s473 = sphi 0, %s457
      %s479 = sphi 0, %s481
      %s482 = sphi 0, %s479
      %s483 = sphi 0, %s482
      %s499 = sphi 0, %s483
      %s503 = sphi 0, %s503
      %s505 = sphi 0, %s503
      %s506 = sphi 0, %s505
      %s520 = sphi 0, %s506
      %s524 = sphi 0, %s524
      %s526 = sphi 0, %s524
      %s527 = sphi 0, %s526
      %s541 = sphi 0, %s527
      %s545 = sphi 0, %s545
      %s547 = sphi 0, %s545
      %s548 = sphi 0, %s547
      %s562 = sphi 0, %s548
      %s566 = sphi 0, %s566
      %s568 = sphi 0, %s566
      %s569 = sphi 0, %s568
      %s583 = sphi 0, %s569
      %s589 = sphi 0, %s591
      %s592 = sphi 0, %s589
      %s593 = sphi 0, %s592
      %s609 = sphi 0, %s593
    $region4: #{tpu_custom_call.1} parent=1 // loop_header_branch
      %52 = sbr.rel (%p50) target = $region8
    $region5: #{tpu_custom_call.1} parent=1 // loop_body
      %s54 = ssub.s32 %s49, 1
      %s55 = ssub.s32 %s49, 2
      %s62 = sadd.s32 1, %s57
      %p63 = scmp.ge.s32.totalorder %s62, 2
      %s64 = scalar_select %p63, 0, %s62
      %s65 = sadd.s32 1, %s56
      %s66 = scalar_select %p63, %s65, %s56
      %p67 = scmp.ge.s32.totalorder %s66, 2
      %s68 = scalar_select %p67, 0, %s66
      %s69 = ssub.s32 %s56, %s68
      %p70 = scmp.eq.s32.totalorder %s69, 0
      %s72 = sadd.s32 %s71, 1
      %s73 = scalar_select %p70, %s71, %s72
      %p76 = pneg %p70
      %p77 = scmp.eq.s32.totalorder %s49, 3
      %p78 = por %p76, %p77
      %p79 = scmp.ne.s32.totalorder %s71, %s74
      %p80 = scmp.eq.s32.totalorder %s49, 0
      %p81 = por %p79, %p80
      %p82 = scmp.ne.s32.totalorder %s71, %s74
      %p83 = scmp.eq.s32.totalorder %s54, 3
      %p84 = por %p82, %p83
      %p85 = scmp.ne.s32.totalorder %s74, %s75
      %p86 = scmp.eq.s32.totalorder %s54, 0
      %p87 = por %p85, %p86
      %p88 = scmp.ne.s32.totalorder %s74, %s75
      %p89 = scmp.eq.s32.totalorder %s55, 3
      %p90 = por %p88, %p89
      %p92 = scmp.ne.s32.totalorder %s75, %s91
      %p93 = scmp.eq.s32.totalorder %s55, 0
      %p94 = por %p92, %p93
      %s95 = ssub.s32 %s56, %s68
      %p96 = scmp.eq.s32.totalorder %s95, 0
      %s98 = sadd.s32 %s97, 1
      %s99 = scalar_select %p96, %s97, %s98
      %p102 = pneg %p96
      %p103 = scmp.eq.s32.totalorder %s49, 3
      %p104 = por %p102, %p103
      %p105 = scmp.ne.s32.totalorder %s97, %s100
      %p106 = scmp.eq.s32.totalorder %s49, 0
      %p107 = por %p105, %p106
      %p108 = scmp.ne.s32.totalorder %s97, %s100
      %p109 = scmp.eq.s32.totalorder %s54, 3
      %p110 = por %p108, %p109
      %p111 = scmp.ne.s32.totalorder %s100, %s101
      %p112 = scmp.eq.s32.totalorder %s54, 0
      %p113 = por %p111, %p112
      %p114 = scmp.ne.s32.totalorder %s100, %s101
      %p115 = scmp.eq.s32.totalorder %s55, 3
      %p116 = por %p114, %p115
      %p118 = scmp.ne.s32.totalorder %s101, %s117
      %p119 = scmp.eq.s32.totalorder %s55, 0
      %p120 = por %p118, %p119
      %s121 = ssub.s32 %s56, %s68
      %s122 = ssub.s32 %s57, %s64
      %s123 = sor.u32 %s121, %s122
      %p124 = scmp.eq.s32.totalorder %s123, 0
      %s126 = sadd.s32 %s125, 1
      %s127 = scalar_select %p124, %s125, %s126
      %p130 = pneg %p124
      %p131 = scmp.eq.s32.totalorder %s49, 3
      %p132 = por %p130, %p131
      %p133 = scmp.ne.s32.totalorder %s125, %s128
      %p134 = scmp.eq.s32.totalorder %s49, 0
      %p135 = por %p133, %p134
      %p136 = scmp.ne.s32.totalorder %s125, %s128
      %p137 = scmp.eq.s32.totalorder %s54, 3
      %p138 = por %p136, %p137
      %p139 = scmp.ne.s32.totalorder %s128, %s129
      %p140 = scmp.eq.s32.totalorder %s54, 0
      %p141 = por %p139, %p140
      %p142 = scmp.ne.s32.totalorder %s128, %s129
      %p143 = scmp.eq.s32.totalorder %s55, 3
      %p144 = por %p142, %p143
      %p146 = scmp.ne.s32.totalorder %s129, %s145
      %p147 = scmp.eq.s32.totalorder %s55, 0
      %p148 = por %p146, %p147
      %s150 = sadd.s32 %s149, 1
      %p153 = scmp.eq.s32.totalorder %s49, 3
      %p154 = scmp.ne.s32.totalorder %s149, %s151
      %p155 = scmp.eq.s32.totalorder %s49, 0
      %p156 = por %p154, %p155
      %p157 = scmp.ne.s32.totalorder %s149, %s151
      %p158 = scmp.eq.s32.totalorder %s54, 3
      %p159 = por %p157, %p158
      %p160 = scmp.ne.s32.totalorder %s151, %s152
      %p161 = scmp.eq.s32.totalorder %s54, 0
      %p162 = por %p160, %p161
      %p163 = scmp.ne.s32.totalorder %s151, %s152
      %p164 = scmp.eq.s32.totalorder %s55, 3
      %p165 = por %p163, %p164
      %p167 = scmp.ne.s32.totalorder %s152, %s166
      %p168 = scmp.eq.s32.totalorder %s55, 0
      %p169 = por %p167, %p168
      %s171 = sadd.s32 %s170, 1
      %p174 = scmp.eq.s32.totalorder %s49, 3
      %p175 = scmp.ne.s32.totalorder %s170, %s172
      %p176 = scmp.eq.s32.totalorder %s49, 0
      %p177 = por %p175, %p176
      %p178 = scmp.ne.s32.totalorder %s170, %s172
      %p179 = scmp.eq.s32.totalorder %s54, 3
      %p180 = por %p178, %p179
      %p181 = scmp.ne.s32.totalorder %s172, %s173
      %p182 = scmp.eq.s32.totalorder %s54, 0
      %p183 = por %p181, %p182
      %p184 = scmp.ne.s32.totalorder %s172, %s173
      %p185 = scmp.eq.s32.totalorder %s55, 3
      %p186 = por %p184, %p185
      %p188 = scmp.ne.s32.totalorder %s173, %s187
      %p189 = scmp.eq.s32.totalorder %s55, 0
      %p190 = por %p188, %p189
      %s191 = ssub.s32 %s57, %s64
      %p192 = scmp.eq.s32.totalorder %s191, 0
      %s194 = sadd.s32 %s193, 1
      %s195 = scalar_select %p192, %s193, %s194
      %p198 = pneg %p192
      %p199 = scmp.eq.s32.totalorder %s49, 3
      %p200 = por %p198, %p199
      %p201 = scmp.ne.s32.totalorder %s193, %s196
      %p202 = scmp.eq.s32.totalorder %s49, 0
      %p203 = por %p201, %p202
      %p204 = scmp.ne.s32.totalorder %s193, %s196
      %p205 = scmp.eq.s32.totalorder %s54, 3
      %p206 = por %p204, %p205
      %p207 = scmp.ne.s32.totalorder %s196, %s197
      %p208 = scmp.eq.s32.totalorder %s54, 0
      %p209 = por %p207, %p208
      %p210 = scmp.ne.s32.totalorder %s196, %s197
      %p211 = scmp.eq.s32.totalorder %s55, 3
      %p212 = por %p210, %p211
      %p214 = scmp.ne.s32.totalorder %s197, %s213
      %p215 = scmp.eq.s32.totalorder %s55, 0
      %p216 = por %p214, %p215
      %s217 = ssub.s32 %s57, %s64
      %p218 = scmp.eq.s32.totalorder %s217, 0
      %s220 = sadd.s32 %s219, 1
      %s221 = scalar_select %p218, %s219, %s220
      %p224 = pneg %p218
      %p225 = scmp.eq.s32.totalorder %s49, 3
      %p226 = por %p224, %p225
      %p227 = scmp.ne.s32.totalorder %s219, %s222
      %p228 = scmp.eq.s32.totalorder %s49, 0
      %p229 = por %p227, %p228
      %p230 = scmp.ne.s32.totalorder %s219, %s222
      %p231 = scmp.eq.s32.totalorder %s54, 3
      %p232 = por %p230, %p231
      %p233 = scmp.ne.s32.totalorder %s222, %s223
      %p234 = scmp.eq.s32.totalorder %s54, 0
      %p235 = por %p233, %p234
      %p236 = scmp.ne.s32.totalorder %s222, %s223
      %p237 = scmp.eq.s32.totalorder %s55, 3
      %p238 = por %p236, %p237
      %p240 = scmp.ne.s32.totalorder %s223, %s239
      %p241 = scmp.eq.s32.totalorder %s55, 0
      %p242 = por %p240, %p241
      %s243 = ssub.s32 %s57, %s64
      %p244 = scmp.eq.s32.totalorder %s243, 0
      %s246 = sadd.s32 %s245, 1
      %s247 = scalar_select %p244, %s245, %s246
      %p250 = pneg %p244
      %p251 = scmp.eq.s32.totalorder %s49, 3
      %p252 = por %p250, %p251
      %p253 = scmp.ne.s32.totalorder %s245, %s248
      %p254 = scmp.eq.s32.totalorder %s49, 0
      %p255 = por %p253, %p254
      %p256 = scmp.ne.s32.totalorder %s245, %s248
      %p257 = scmp.eq.s32.totalorder %s54, 3
      %p258 = por %p256, %p257
      %p259 = scmp.ne.s32.totalorder %s248, %s249
      %p260 = scmp.eq.s32.totalorder %s54, 0
      %p261 = por %p259, %p260
      %p262 = scmp.ne.s32.totalorder %s248, %s249
      %p263 = scmp.eq.s32.totalorder %s55, 3
      %p264 = por %p262, %p263
      %p266 = scmp.ne.s32.totalorder %s249, %s265
      %p267 = scmp.eq.s32.totalorder %s55, 0
      %p268 = por %p266, %p267
      %s269 = ssub.s32 %s57, %s64
      %p270 = scmp.eq.s32.totalorder %s269, 0
      %s272 = sadd.s32 %s271, 1
      %s273 = scalar_select %p270, %s271, %s272
      %p276 = pneg %p270
      %p277 = scmp.eq.s32.totalorder %s49, 3
      %p278 = por %p276, %p277
      %p279 = scmp.ne.s32.totalorder %s271, %s274
      %p280 = scmp.eq.s32.totalorder %s49, 0
      %p281 = por %p279, %p280
      %p282 = scmp.ne.s32.totalorder %s271, %s274
      %p283 = scmp.eq.s32.totalorder %s54, 3
      %p284 = por %p282, %p283
      %p285 = scmp.ne.s32.totalorder %s274, %s275
      %p286 = scmp.eq.s32.totalorder %s54, 0
      %p287 = por %p285, %p286
      %p288 = scmp.ne.s32.totalorder %s274, %s275
      %p289 = scmp.eq.s32.totalorder %s55, 3
      %p290 = por %p288, %p289
      %p292 = scmp.ne.s32.totalorder %s275, %s291
      %p293 = scmp.eq.s32.totalorder %s55, 0
      %p294 = por %p292, %p293
      %s295 = ssub.s32 %s57, %s64
      %p296 = scmp.eq.s32.totalorder %s295, 0
      %s298 = sadd.s32 %s297, 1
      %s299 = scalar_select %p296, %s297, %s298
      %p302 = pneg %p296
      %p303 = scmp.eq.s32.totalorder %s49, 3
      %p304 = por %p302, %p303
      %p305 = scmp.ne.s32.totalorder %s297, %s300
      %p306 = scmp.eq.s32.totalorder %s49, 0
      %p307 = por %p305, %p306
      %p308 = scmp.ne.s32.totalorder %s297, %s300
      %p309 = scmp.eq.s32.totalorder %s54, 3
      %p310 = por %p308, %p309
      %p311 = scmp.ne.s32.totalorder %s300, %s301
      %p312 = scmp.eq.s32.totalorder %s54, 0
      %p313 = por %p311, %p312
      %p314 = scmp.ne.s32.totalorder %s300, %s301
      %p315 = scmp.eq.s32.totalorder %s55, 3
      %p316 = por %p314, %p315
      %p318 = scmp.ne.s32.totalorder %s301, %s317
      %p319 = scmp.eq.s32.totalorder %s55, 0
      %p320 = por %p318, %p319
      %s321 = ssub.s32 %s57, %s64
      %p322 = scmp.eq.s32.totalorder %s321, 0
      %s324 = sadd.s32 %s323, 1
      %s325 = scalar_select %p322, %s323, %s324
      %p328 = pneg %p322
      %p329 = scmp.eq.s32.totalorder %s49, 3
      %p330 = por %p328, %p329
      %p331 = scmp.ne.s32.totalorder %s323, %s326
      %p332 = scmp.eq.s32.totalorder %s49, 0
      %p333 = por %p331, %p332
      %p334 = scmp.ne.s32.totalorder %s323, %s326
      %p335 = scmp.eq.s32.totalorder %s54, 3
      %p336 = por %p334, %p335
      %p337 = scmp.ne.s32.totalorder %s326, %s327
      %p338 = scmp.eq.s32.totalorder %s54, 0
      %p339 = por %p337, %p338
      %p340 = scmp.ne.s32.totalorder %s326, %s327
      %p341 = scmp.eq.s32.totalorder %s55, 3
      %p342 = por %p340, %p341
      %p344 = scmp.ne.s32.totalorder %s327, %s343
      %p345 = scmp.eq.s32.totalorder %s55, 0
      %p346 = por %p344, %p345
      %s347 = ssub.s32 %s57, %s64
      %p348 = scmp.eq.s32.totalorder %s347, 0
      %s350 = sadd.s32 %s349, 1
      %s351 = scalar_select %p348, %s349, %s350
      %p354 = pneg %p348
      %p355 = scmp.eq.s32.totalorder %s49, 3
      %p356 = por %p354, %p355
      %p357 = scmp.ne.s32.totalorder %s349, %s352
      %p358 = scmp.eq.s32.totalorder %s49, 0
      %p359 = por %p357, %p358
      %p360 = scmp.ne.s32.totalorder %s349, %s352
      %p361 = scmp.eq.s32.totalorder %s54, 3
      %p362 = por %p360, %p361
      %p363 = scmp.ne.s32.totalorder %s352, %s353
      %p364 = scmp.eq.s32.totalorder %s54, 0
      %p365 = por %p363, %p364
      %p366 = scmp.ne.s32.totalorder %s352, %s353
      %p367 = scmp.eq.s32.totalorder %s55, 3
      %p368 = por %p366, %p367
      %p370 = scmp.ne.s32.totalorder %s353, %s369
      %p371 = scmp.eq.s32.totalorder %s55, 0
      %p372 = por %p370, %p371
      %s373 = ssub.s32 %s57, %s64
      %p374 = scmp.eq.s32.totalorder %s373, 0
      %s376 = sadd.s32 %s375, 1
      %s377 = scalar_select %p374, %s375, %s376
      %p380 = pneg %p374
      %p381 = scmp.eq.s32.totalorder %s49, 3
      %p382 = por %p380, %p381
      %p383 = scmp.ne.s32.totalorder %s375, %s378
      %p384 = scmp.eq.s32.totalorder %s49, 0
      %p385 = por %p383, %p384
      %p386 = scmp.ne.s32.totalorder %s375, %s378
      %p387 = scmp.eq.s32.totalorder %s54, 3
      %p388 = por %p386, %p387
      %p389 = scmp.ne.s32.totalorder %s378, %s379
      %p390 = scmp.eq.s32.totalorder %s54, 0
      %p391 = por %p389, %p390
      %p392 = scmp.ne.s32.totalorder %s378, %s379
      %p393 = scmp.eq.s32.totalorder %s55, 3
      %p394 = por %p392, %p393
      %p396 = scmp.ne.s32.totalorder %s379, %s395
      %p397 = scmp.eq.s32.totalorder %s55, 0
      %p398 = por %p396, %p397
      %s399 = ssub.s32 %s57, %s64
      %p400 = scmp.eq.s32.totalorder %s399, 0
      %s402 = sadd.s32 %s401, 1
      %s403 = scalar_select %p400, %s401, %s402
      %p406 = pneg %p400
      %p407 = scmp.eq.s32.totalorder %s49, 3
      %p408 = por %p406, %p407
      %p409 = scmp.ne.s32.totalorder %s401, %s404
      %p410 = scmp.eq.s32.totalorder %s49, 0
      %p411 = por %p409, %p410
      %p412 = scmp.ne.s32.totalorder %s401, %s404
      %p413 = scmp.eq.s32.totalorder %s54, 3
      %p414 = por %p412, %p413
      %p415 = scmp.ne.s32.totalorder %s404, %s405
      %p416 = scmp.eq.s32.totalorder %s54, 0
      %p417 = por %p415, %p416
      %p418 = scmp.ne.s32.totalorder %s404, %s405
      %p419 = scmp.eq.s32.totalorder %s55, 3
      %p420 = por %p418, %p419
      %p422 = scmp.ne.s32.totalorder %s405, %s421
      %p423 = scmp.eq.s32.totalorder %s55, 0
      %p424 = por %p422, %p423
      %s425 = ssub.s32 %s57, %s64
      %p426 = scmp.eq.s32.totalorder %s425, 0
      %s428 = sadd.s32 %s427, 1
      %s429 = scalar_select %p426, %s427, %s428
      %p432 = pneg %p426
      %p433 = scmp.eq.s32.totalorder %s49, 3
      %p434 = por %p432, %p433
      %p435 = scmp.ne.s32.totalorder %s427, %s430
      %p436 = scmp.eq.s32.totalorder %s49, 0
      %p437 = por %p435, %p436
      %p438 = scmp.ne.s32.totalorder %s427, %s430
      %p439 = scmp.eq.s32.totalorder %s54, 3
      %p440 = por %p438, %p439
      %p441 = scmp.ne.s32.totalorder %s430, %s431
      %p442 = scmp.eq.s32.totalorder %s54, 0
      %p443 = por %p441, %p442
      %p444 = scmp.ne.s32.totalorder %s430, %s431
      %p445 = scmp.eq.s32.totalorder %s55, 3
      %p446 = por %p444, %p445
      %p448 = scmp.ne.s32.totalorder %s431, %s447
      %p449 = scmp.eq.s32.totalorder %s55, 0
      %p450 = por %p448, %p449
      %s451 = ssub.s32 %s57, %s64
      %p452 = scmp.eq.s32.totalorder %s451, 0
      %s454 = sadd.s32 %s453, 1
      %s455 = scalar_select %p452, %s453, %s454
      %p458 = pneg %p452
      %p459 = scmp.eq.s32.totalorder %s49, 3
      %p460 = por %p458, %p459
      %p461 = scmp.ne.s32.totalorder %s453, %s456
      %p462 = scmp.eq.s32.totalorder %s49, 0
      %p463 = por %p461, %p462
      %p464 = scmp.ne.s32.totalorder %s453, %s456
      %p465 = scmp.eq.s32.totalorder %s54, 3
      %p466 = por %p464, %p465
      %p467 = scmp.ne.s32.totalorder %s456, %s457
      %p468 = scmp.eq.s32.totalorder %s54, 0
      %p469 = por %p467, %p468
      %p470 = scmp.ne.s32.totalorder %s456, %s457
      %p471 = scmp.eq.s32.totalorder %s55, 3
      %p472 = por %p470, %p471
      %p474 = scmp.ne.s32.totalorder %s457, %s473
      %p475 = scmp.eq.s32.totalorder %s55, 0
      %p476 = por %p474, %p475
      %s477 = ssub.s32 %s57, %s64
      %p478 = scmp.eq.s32.totalorder %s477, 0
      %s480 = sadd.s32 %s479, 1
      %s481 = scalar_select %p478, %s479, %s480
      %p484 = pneg %p478
      %p485 = scmp.eq.s32.totalorder %s49, 3
      %p486 = por %p484, %p485
      %p487 = scmp.ne.s32.totalorder %s479, %s482
      %p488 = scmp.eq.s32.totalorder %s49, 0
      %p489 = por %p487, %p488
      %p490 = scmp.ne.s32.totalorder %s479, %s482
      %p491 = scmp.eq.s32.totalorder %s54, 3
      %p492 = por %p490, %p491
      %p493 = scmp.ne.s32.totalorder %s482, %s483
      %p494 = scmp.eq.s32.totalorder %s54, 0
      %p495 = por %p493, %p494
      %p496 = scmp.ne.s32.totalorder %s482, %s483
      %p497 = scmp.eq.s32.totalorder %s55, 3
      %p498 = por %p496, %p497
      %p500 = scmp.ne.s32.totalorder %s483, %s499
      %p501 = scmp.eq.s32.totalorder %s55, 0
      %p502 = por %p500, %p501
      %s504 = sadd.s32 %s503, 1
      %p507 = scmp.eq.s32.totalorder %s49, 3
      %p508 = scmp.ne.s32.totalorder %s503, %s505
      %p509 = scmp.eq.s32.totalorder %s49, 0
      %p510 = por %p508, %p509
      %p511 = scmp.ne.s32.totalorder %s503, %s505
      %p512 = scmp.eq.s32.totalorder %s54, 3
      %p513 = por %p511, %p512
      %p514 = scmp.ne.s32.totalorder %s505, %s506
      %p515 = scmp.eq.s32.totalorder %s54, 0
      %p516 = por %p514, %p515
      %p517 = scmp.ne.s32.totalorder %s505, %s506
      %p518 = scmp.eq.s32.totalorder %s55, 3
      %p519 = por %p517, %p518
      %p521 = scmp.ne.s32.totalorder %s506, %s520
      %p522 = scmp.eq.s32.totalorder %s55, 0
      %p523 = por %p521, %p522
      %s525 = sadd.s32 %s524, 1
      %p528 = scmp.eq.s32.totalorder %s49, 3
      %p529 = scmp.ne.s32.totalorder %s524, %s526
      %p530 = scmp.eq.s32.totalorder %s49, 0
      %p531 = por %p529, %p530
      %p532 = scmp.ne.s32.totalorder %s524, %s526
      %p533 = scmp.eq.s32.totalorder %s54, 3
      %p534 = por %p532, %p533
      %p535 = scmp.ne.s32.totalorder %s526, %s527
      %p536 = scmp.eq.s32.totalorder %s54, 0
      %p537 = por %p535, %p536
      %p538 = scmp.ne.s32.totalorder %s526, %s527
      %p539 = scmp.eq.s32.totalorder %s55, 3
      %p540 = por %p538, %p539
      %p542 = scmp.ne.s32.totalorder %s527, %s541
      %p543 = scmp.eq.s32.totalorder %s55, 0
      %p544 = por %p542, %p543
      %s546 = sadd.s32 %s545, 1
      %p549 = scmp.eq.s32.totalorder %s49, 3
      %p550 = scmp.ne.s32.totalorder %s545, %s547
      %p551 = scmp.eq.s32.totalorder %s49, 0
      %p552 = por %p550, %p551
      %p553 = scmp.ne.s32.totalorder %s545, %s547
      %p554 = scmp.eq.s32.totalorder %s54, 3
      %p555 = por %p553, %p554
      %p556 = scmp.ne.s32.totalorder %s547, %s548
      %p557 = scmp.eq.s32.totalorder %s54, 0
      %p558 = por %p556, %p557
      %p559 = scmp.ne.s32.totalorder %s547, %s548
      %p560 = scmp.eq.s32.totalorder %s55, 3
      %p561 = por %p559, %p560
      %p563 = scmp.ne.s32.totalorder %s548, %s562
      %p564 = scmp.eq.s32.totalorder %s55, 0
      %p565 = por %p563, %p564
      %s567 = sadd.s32 %s566, 1
      %p570 = scmp.eq.s32.totalorder %s49, 3
      %p571 = scmp.ne.s32.totalorder %s566, %s568
      %p572 = scmp.eq.s32.totalorder %s49, 0
      %p573 = por %p571, %p572
      %p574 = scmp.ne.s32.totalorder %s566, %s568
      %p575 = scmp.eq.s32.totalorder %s54, 3
      %p576 = por %p574, %p575
      %p577 = scmp.ne.s32.totalorder %s568, %s569
      %p578 = scmp.eq.s32.totalorder %s54, 0
      %p579 = por %p577, %p578
      %p580 = scmp.ne.s32.totalorder %s568, %s569
      %p581 = scmp.eq.s32.totalorder %s55, 3
      %p582 = por %p580, %p581
      %p584 = scmp.ne.s32.totalorder %s569, %s583
      %p585 = scmp.eq.s32.totalorder %s55, 0
      %p586 = por %p584, %p585
      %s587 = ssub.s32 %s56, %s68
      %p588 = scmp.eq.s32.totalorder %s587, 0
      %s590 = sadd.s32 %s589, 1
      %s591 = scalar_select %p588, %s589, %s590
      %p594 = pneg %p588
      %p595 = scmp.eq.s32.totalorder %s49, 3
      %p596 = por %p594, %p595
      %p597 = scmp.ne.s32.totalorder %s589, %s592
      %p598 = scmp.eq.s32.totalorder %s49, 0
      %p599 = por %p597, %p598
      %p600 = scmp.ne.s32.totalorder %s589, %s592
      %p601 = scmp.eq.s32.totalorder %s54, 3
      %p602 = por %p600, %p601
      %p603 = scmp.ne.s32.totalorder %s592, %s593
      %p604 = scmp.eq.s32.totalorder %s54, 0
      %p605 = por %p603, %p604
      %p606 = scmp.ne.s32.totalorder %s592, %s593
      %p607 = scmp.eq.s32.totalorder %s55, 3
      %p608 = por %p606, %p607
      %p610 = scmp.ne.s32.totalorder %s593, %s609
      %p611 = scmp.eq.s32.totalorder %s55, 0
      %p612 = por %p610, %p611
      %p613 = scmp.le.s32.totalorder 1, %s49
      %p614 = scmp.lt.s32.totalorder %s49, 5
      %p615 = pnand %p613, %p614
      %p616 = pneg %p615
      // Predicated region
      $region9: #{tpu_custom_call.1} parent=5 // pred_check
        _
      $region10: #{tpu_custom_call.1} parent=5 // pred_check_branch
        %618 = sbr.rel (%p615) target = $region12
      $region11: #{tpu_custom_call.1} parent=5 // pred_region
        %s619 = ssub.s32 %s49, 1
        // Predicated region
        $region13: #{tpu_custom_call.1} parent=11 // pred_check
          %p620 = pneg %p162
        $region14: #{tpu_custom_call.1} parent=11 // pred_check_branch
          %622 = sbr.rel (%p620) target = $region16
        $region15: #{tpu_custom_call.1} parent=11 // pred_region
          %s624 = ssub.s32 128, 128
          %625 = vsyncadd [#allocation9], %s624
          %s626 = sshll.u32 [#allocation8], 4
          %s627 = int_to_ptr.vmem [resolvable:$true] %s626
          %632 = dma.hbm_to_vmem [thread:$0]  %s3, 128, %s627, [#allocation9], 64, 64, 4
        $region16: #{tpu_custom_call.1} parent=11 // pred_fallthru
          _
        // Predicated region
        $region17: #{tpu_custom_call.1} parent=11 // pred_check
          %p633 = pneg %p183
        $region18: #{tpu_custom_call.1} parent=11 // pred_check_branch
          %635 = sbr.rel (%p633) target = $region20
        $region19: #{tpu_custom_call.1} parent=11 // pred_region
          %s637 = ssub.s32 16, 16
          %638 = vsyncadd [#allocation9], %s637
          %s640 = sshll.u32 [#allocation10], 4
          %s641 = int_to_ptr.vmem [resolvable:$true] %s640
          %643 = dma.hbm_to_vmem [thread:$0]  %s4, 16, %s641, [#allocation9]
        $region20: #{tpu_custom_call.1} parent=11 // pred_fallthru
          _
        // Predicated region
        $region21: #{tpu_custom_call.1} parent=11 // pred_check
          %p644 = pneg %p516
        $region22: #{tpu_custom_call.1} parent=11 // pred_check_branch
          %646 = sbr.rel (%p644) target = $region24
        $region23: #{tpu_custom_call.1} parent=11 // pred_region
          _
        $region24: #{tpu_custom_call.1} parent=11 // pred_fallthru
          _
        // Predicated region
        $region25: #{tpu_custom_call.1} parent=11 // pred_check
          %p647 = pneg %p537
        $region26: #{tpu_custom_call.1} parent=11 // pred_check_branch
          %649 = sbr.rel (%p647) target = $region28
        $region27: #{tpu_custom_call.1} parent=11 // pred_region
          _
        $region28: #{tpu_custom_call.1} parent=11 // pred_fallthru
          _
        // Predicated region
        $region29: #{tpu_custom_call.1} parent=11 // pred_check
          %p650 = pneg %p558
        $region30: #{tpu_custom_call.1} parent=11 // pred_check_branch
          %652 = sbr.rel (%p650) target = $region32
        $region31: #{tpu_custom_call.1} parent=11 // pred_region
          _
        $region32: #{tpu_custom_call.1} parent=11 // pred_fallthru
          _
        // Predicated region
        $region33: #{tpu_custom_call.1} parent=11 // pred_check
          %p653 = pneg %p579
        $region34: #{tpu_custom_call.1} parent=11 // pred_check_branch
          %655 = sbr.rel (%p653) target = $region36
        $region35: #{tpu_custom_call.1} parent=11 // pred_region
          _
        $region36: #{tpu_custom_call.1} parent=11 // pred_fallthru
          _
      $region12: #{tpu_custom_call.1} parent=5 // pred_fallthru
        _
      %p656 = scmp.lt.s32.totalorder %s49, 4
      // Predicated region
      $region37: #{tpu_custom_call.1} parent=5 // pred_check
        %p657 = pneg %p656
      $region38: #{tpu_custom_call.1} parent=5 // pred_check_branch
        %659 = sbr.rel (%p657) target = $region40
      $region39: #{tpu_custom_call.1} parent=5 // pred_region
        // Predicated region
        $region41: #{tpu_custom_call.1} parent=39 // pred_check
          %p660 = pneg %p81
        $region42: #{tpu_custom_call.1} parent=39 // pred_check_branch
          %662 = sbr.rel (%p660) target = $region44
        $region43: #{tpu_custom_call.1} parent=39 // pred_region
          %p663 = scmp.lt.s32.totalorder %s56, 1
          %s664 = scalar_select %p663, %s56, 1
          %s665 = smul.addr %s664, 2
          %s666 = smul.addr %s665, 8
          %s667 = scalar_lea.vmem %s0, %s666
        $region44: #{tpu_custom_call.1} parent=39 // pred_fallthru
          _
        // Predicated region
        $region45: #{tpu_custom_call.1} parent=39 // pred_check
          %p668 = pneg %p107
        $region46: #{tpu_custom_call.1} parent=39 // pred_check_branch
          %670 = sbr.rel (%p668) target = $region48
        $region47: #{tpu_custom_call.1} parent=39 // pred_region
          %p671 = scmp.lt.s32.totalorder %s56, 1
          %s672 = scalar_select %p671, %s56, 1
          %s673 = smul.addr %s672, 4
          %s674 = smul.addr %s673, 8
          %s675 = scalar_lea.vmem %s1, %s674
        $region48: #{tpu_custom_call.1} parent=39 // pred_fallthru
          _
        // Predicated region
        $region49: #{tpu_custom_call.1} parent=39 // pred_check
          %p676 = pneg %p135
        $region50: #{tpu_custom_call.1} parent=39 // pred_check_branch
          %678 = sbr.rel (%p676) target = $region52
        $region51: #{tpu_custom_call.1} parent=39 // pred_region
          %s679 = sand.u32 %s125, 1
          %s680 = scalar_lea.sflag [#allocation6], %s679
          %s681 = sand.u32 %s125, 1
          %s682 = scalar_lea.vmem [#allocation5], %s681
          %s684 = ssub.s32 16, 16
          %685 = vsyncadd %s680, %s684
          %s686 = smul.addr %s56, 2
          %s687 = sadd.s32 %s57, %s686
          %s688 = smul.addr %s687, 16
          %s689 = scalar_lea.hbm %s2, %s688
          %s691 = sshll.u32 %s682, 4
          %s692 = int_to_ptr.vmem [resolvable:$true] %s691
          %694 = dma.hbm_to_vmem [thread:$0]  %s689, 16, %s692, %s680
        $region52: #{tpu_custom_call.1} parent=39 // pred_fallthru
          _
        // Predicated region
        $region53: #{tpu_custom_call.1} parent=39 // pred_check
          %p695 = pneg %p203
        $region54: #{tpu_custom_call.1} parent=39 // pred_check_branch
          %697 = sbr.rel (%p695) target = $region56
        $region55: #{tpu_custom_call.1} parent=39 // pred_region
          %s698 = sand.u32 %s49, 1
          %s699 = scalar_lea.sflag [#allocation12], %s698
          %s700 = sand.u32 %s193, 1
          %s701 = smul.addr %s700, 16
          %s702 = scalar_lea.vmem [#allocation11], %s701
          %s704 = ssub.s32 256, 256
          %705 = vsyncadd %s699, %s704
          %s706 = smul.addr %s57, 4
          %s707 = smul.addr %s706, 64
          %s708 = scalar_lea.hbm %s5, %s707
          %s709 = sshll.u32 %s702, 4
          %s710 = int_to_ptr.vmem [resolvable:$true] %s709
          %715 = dma.hbm_to_vmem [thread:$0]  %s708, 256, %s710, %s699, 64, 64, 4
        $region56: #{tpu_custom_call.1} parent=39 // pred_fallthru
          _
        // Predicated region
        $region57: #{tpu_custom_call.1} parent=39 // pred_check
          %p716 = pneg %p229
        $region58: #{tpu_custom_call.1} parent=39 // pred_check_branch
          %718 = sbr.rel (%p716) target = $region60
        $region59: #{tpu_custom_call.1} parent=39 // pred_region
          %s719 = sand.u32 %s49, 1
          %s720 = scalar_lea.sflag [#allocation12], %s719
          %s721 = sand.u32 %s219, 1
          %s722 = smul.addr %s721, 16
          %s723 = scalar_lea.vmem [#allocation13], %s722
          %s725 = ssub.s32 256, 256
          %726 = vsyncadd %s720, %s725
          %s727 = smul.addr %s57, 4
          %s728 = smul.addr %s727, 64
          %s729 = scalar_lea.hbm %s6, %s728
          %s730 = sshll.u32 %s723, 4
          %s731 = int_to_ptr.vmem [resolvable:$true] %s730
          %736 = dma.hbm_to_vmem [thread:$0]  %s729, 256, %s731, %s720, 64, 64, 4
        $region60: #{tpu_custom_call.1} parent=39 // pred_fallthru
          _
        // Predicated region
        $region61: #{tpu_custom_call.1} parent=39 // pred_check
          %p737 = pneg %p255
        $region62: #{tpu_custom_call.1} parent=39 // pred_check_branch
          %739 = sbr.rel (%p737) target = $region64
        $region63: #{tpu_custom_call.1} parent=39 // pred_region
          %s740 = sand.u32 %s49, 1
          %s741 = scalar_lea.sflag [#allocation15], %s740
          %s742 = sand.u32 %s245, 1
          %s743 = scalar_lea.vmem [#allocation14], %s742
          %s745 = ssub.s32 16, 16
          %746 = vsyncadd %s741, %s745
          %s747 = smul.addr %s57, 16
          %s748 = scalar_lea.hbm %s7, %s747
          %s750 = sshll.u32 %s743, 4
          %s751 = int_to_ptr.vmem [resolvable:$true] %s750
          %753 = dma.hbm_to_vmem [thread:$0]  %s748, 16, %s751, %s741
        $region64: #{tpu_custom_call.1} parent=39 // pred_fallthru
          _
        // Predicated region
        $region65: #{tpu_custom_call.1} parent=39 // pred_check
          %p754 = pneg %p281
        $region66: #{tpu_custom_call.1} parent=39 // pred_check_branch
          %756 = sbr.rel (%p754) target = $region68
        $region67: #{tpu_custom_call.1} parent=39 // pred_region
          %s757 = sand.u32 %s49, 1
          %s758 = scalar_lea.sflag [#allocation15], %s757
          %s759 = sand.u32 %s271, 1
          %s760 = scalar_lea.vmem [#allocation16], %s759
          %s762 = ssub.s32 16, 16
          %763 = vsyncadd %s758, %s762
          %s764 = smul.addr %s57, 16
          %s765 = scalar_lea.hbm %s8, %s764
          %s767 = sshll.u32 %s760, 4
          %s768 = int_to_ptr.vmem [resolvable:$true] %s767
          %770 = dma.hbm_to_vmem [thread:$0]  %s765, 16, %s768, %s758
        $region68: #{tpu_custom_call.1} parent=39 // pred_fallthru
          _
        // Predicated region
        $region69: #{tpu_custom_call.1} parent=39 // pred_check
          %p771 = pneg %p307
        $region70: #{tpu_custom_call.1} parent=39 // pred_check_branch
          %773 = sbr.rel (%p771) target = $region72
        $region71: #{tpu_custom_call.1} parent=39 // pred_region
          %p774 = scmp.lt.s32.totalorder %s57, 1
          %s775 = scalar_select %p774, %s57, 1
          %s776 = smul.addr %s775, 12
          %s777 = smul.addr %s776, 4
          %s778 = scalar_lea.vmem %s9, %s777
        $region72: #{tpu_custom_call.1} parent=39 // pred_fallthru
          _
        // Predicated region
        $region73: #{tpu_custom_call.1} parent=39 // pred_check
          %p779 = pneg %p333
        $region74: #{tpu_custom_call.1} parent=39 // pred_check_branch
          %781 = sbr.rel (%p779) target = $region76
        $region75: #{tpu_custom_call.1} parent=39 // pred_region
          %s782 = sand.u32 %s49, 1
          %s783 = scalar_lea.sflag [#allocation18], %s782
          %s784 = sand.u32 %s323, 1
          %s785 = smul.addr %s784, 48
          %s786 = scalar_lea.vmem [#allocation17], %s785
          %s788 = ssub.s32 768, 768
          %789 = vsyncadd %s783, %s788
          %s790 = smul.addr %s57, 12
          %s791 = smul.addr %s790, 64
          %s792 = scalar_lea.hbm %s10, %s791
          %s793 = sshll.u32 %s786, 4
          %s794 = int_to_ptr.vmem [resolvable:$true] %s793
          %799 = dma.hbm_to_vmem [thread:$0]  %s792, 768, %s794, %s783, 64, 64, 4
        $region76: #{tpu_custom_call.1} parent=39 // pred_fallthru
          _
        // Predicated region
        $region77: #{tpu_custom_call.1} parent=39 // pred_check
          %p800 = pneg %p359
        $region78: #{tpu_custom_call.1} parent=39 // pred_check_branch
          %802 = sbr.rel (%p800) target = $region80
        $region79: #{tpu_custom_call.1} parent=39 // pred_region
          %s803 = sand.u32 %s49, 1
          %s804 = scalar_lea.sflag [#allocation18], %s803
          %s805 = sand.u32 %s349, 1
          %s806 = scalar_lea.vmem [#allocation19], %s805
          %s808 = ssub.s32 16, 16
          %809 = vsyncadd %s804, %s808
          %s810 = smul.addr %s57, 16
          %s811 = scalar_lea.hbm %s11, %s810
          %s813 = sshll.u32 %s806, 4
          %s814 = int_to_ptr.vmem [resolvable:$true] %s813
          %816 = dma.hbm_to_vmem [thread:$0]  %s811, 16, %s814, %s804
        $region80: #{tpu_custom_call.1} parent=39 // pred_fallthru
          _
        // Predicated region
        $region81: #{tpu_custom_call.1} parent=39 // pred_check
          %p817 = pneg %p385
        $region82: #{tpu_custom_call.1} parent=39 // pred_check_branch
          %819 = sbr.rel (%p817) target = $region84
        $region83: #{tpu_custom_call.1} parent=39 // pred_region
          %s820 = sand.u32 %s49, 1
          %s821 = scalar_lea.sflag [#allocation21], %s820
          %s822 = sand.u32 %s375, 1
          %s823 = scalar_lea.vmem [#allocation20], %s822
          %s825 = ssub.s32 16, 16
          %826 = vsyncadd %s821, %s825
          %s827 = smul.addr %s57, 16
          %s828 = scalar_lea.hbm %s12, %s827
          %s830 = sshll.u32 %s823, 4
          %s831 = int_to_ptr.vmem [resolvable:$true] %s830
          %833 = dma.hbm_to_vmem [thread:$0]  %s828, 16, %s831, %s821
        $region84: #{tpu_custom_call.1} parent=39 // pred_fallthru
          _
        // Predicated region
        $region85: #{tpu_custom_call.1} parent=39 // pred_check
          %p834 = pneg %p411
        $region86: #{tpu_custom_call.1} parent=39 // pred_check_branch
          %836 = sbr.rel (%p834) target = $region88
        $region87: #{tpu_custom_call.1} parent=39 // pred_region
          %p837 = scmp.lt.s32.totalorder %s57, 1
          %s838 = scalar_select %p837, %s57, 1
          %s839 = smul.addr %s838, 4
          %s840 = smul.addr %s839, 4
          %s841 = scalar_lea.vmem %s13, %s840
        $region88: #{tpu_custom_call.1} parent=39 // pred_fallthru
          _
        // Predicated region
        $region89: #{tpu_custom_call.1} parent=39 // pred_check
          %p842 = pneg %p437
        $region90: #{tpu_custom_call.1} parent=39 // pred_check_branch
          %844 = sbr.rel (%p842) target = $region92
        $region91: #{tpu_custom_call.1} parent=39 // pred_region
          %s845 = sand.u32 %s49, 1
          %s846 = scalar_lea.sflag [#allocation21], %s845
          %s847 = sand.u32 %s427, 1
          %s848 = smul.addr %s847, 16
          %s849 = scalar_lea.vmem [#allocation22], %s848
          %s851 = ssub.s32 256, 256
          %852 = vsyncadd %s846, %s851
          %s853 = smul.addr %s57, 4
          %s854 = smul.addr %s853, 64
          %s855 = scalar_lea.hbm %s14, %s854
          %s856 = sshll.u32 %s849, 4
          %s857 = int_to_ptr.vmem [resolvable:$true] %s856
          %862 = dma.hbm_to_vmem [thread:$0]  %s855, 256, %s857, %s846, 64, 64, 4
        $region92: #{tpu_custom_call.1} parent=39 // pred_fallthru
          _
        // Predicated region
        $region93: #{tpu_custom_call.1} parent=39 // pred_check
          %p863 = pneg %p463
        $region94: #{tpu_custom_call.1} parent=39 // pred_check_branch
          %865 = sbr.rel (%p863) target = $region96
        $region95: #{tpu_custom_call.1} parent=39 // pred_region
          %s866 = sand.u32 %s49, 1
          %s867 = scalar_lea.sflag [#allocation24], %s866
          %s868 = sand.u32 %s453, 1
          %s869 = scalar_lea.vmem [#allocation23], %s868
          %s871 = ssub.s32 16, 16
          %872 = vsyncadd %s867, %s871
          %s873 = smul.addr %s57, 16
          %s874 = scalar_lea.hbm %s15, %s873
          %s876 = sshll.u32 %s869, 4
          %s877 = int_to_ptr.vmem [resolvable:$true] %s876
          %879 = dma.hbm_to_vmem [thread:$0]  %s874, 16, %s877, %s867
        $region96: #{tpu_custom_call.1} parent=39 // pred_fallthru
          _
        // Predicated region
        $region97: #{tpu_custom_call.1} parent=39 // pred_check
          %p880 = pneg %p489
        $region98: #{tpu_custom_call.1} parent=39 // pred_check_branch
          %882 = sbr.rel (%p880) target = $region100
        $region99: #{tpu_custom_call.1} parent=39 // pred_region
          %s883 = sand.u32 %s49, 1
          %s884 = scalar_lea.sflag [#allocation24], %s883
          %s885 = sand.u32 %s479, 1
          %s886 = scalar_lea.vmem [#allocation25], %s885
          %s888 = ssub.s32 16, 16
          %889 = vsyncadd %s884, %s888
          %s890 = smul.addr %s57, 16
          %s891 = scalar_lea.hbm %s16, %s890
          %s893 = sshll.u32 %s886, 4
          %s894 = int_to_ptr.vmem [resolvable:$true] %s893
          %896 = dma.hbm_to_vmem [thread:$0]  %s891, 16, %s894, %s884
        $region100: #{tpu_custom_call.1} parent=39 // pred_fallthru
          _
      $region40: #{tpu_custom_call.1} parent=5 // pred_fallthru
        _
      %p897 = scmp.le.s32.totalorder 1, %s49
      %p898 = scmp.lt.s32.totalorder %s49, 5
      %p899 = pnand %p897, %p898
      %p900 = pneg %p899
      // Predicated region
      $region101: #{tpu_custom_call.1} parent=5 // pred_check
        _
      $region102: #{tpu_custom_call.1} parent=5 // pred_check_branch
        %902 = sbr.rel (%p899) target = $region104
      $region103: #{tpu_custom_call.1} parent=5 // pred_region
        %s903 = ssub.s32 %s49, 1
        %s904 = sand.u32 %s128, 1
        %s905 = scalar_lea.sflag [#allocation6], %s904
        %s906 = sand.u32 %s128, 1
        %s907 = scalar_lea.vmem [#allocation5], %s906
        // Predicated region
        $region105: #{tpu_custom_call.1} parent=103 // pred_check
          %p908 = pneg %p141
        $region106: #{tpu_custom_call.1} parent=103 // pred_check_branch
          %910 = sbr.rel (%p908) target = $region108
        $region107: #{tpu_custom_call.1} parent=103 // pred_region
          %911 = dma.done %s905, 16
        $region108: #{tpu_custom_call.1} parent=103 // pred_fallthru
          _
        // Predicated region
        $region109: #{tpu_custom_call.1} parent=103 // pred_check
          %p912 = pneg %p162
        $region110: #{tpu_custom_call.1} parent=103 // pred_check_branch
          %914 = sbr.rel (%p912) target = $region112
        $region111: #{tpu_custom_call.1} parent=103 // pred_region
          %915 = dma.done [#allocation9], 128
        $region112: #{tpu_custom_call.1} parent=103 // pred_fallthru
          _
        // Predicated region
        $region113: #{tpu_custom_call.1} parent=103 // pred_check
          %p916 = pneg %p183
        $region114: #{tpu_custom_call.1} parent=103 // pred_check_branch
          %918 = sbr.rel (%p916) target = $region116
        $region115: #{tpu_custom_call.1} parent=103 // pred_region
          %919 = dma.done [#allocation9], 16
        $region116: #{tpu_custom_call.1} parent=103 // pred_fallthru
          _
        %s920 = sand.u32 %s54, 1
        %s921 = scalar_lea.sflag [#allocation12], %s920
        %s922 = sand.u32 %s196, 1
        %s923 = smul.addr %s922, 16
        %s924 = scalar_lea.vmem [#allocation11], %s923
        // Predicated region
        $region117: #{tpu_custom_call.1} parent=103 // pred_check
          %p925 = pneg %p209
        $region118: #{tpu_custom_call.1} parent=103 // pred_check_branch
          %927 = sbr.rel (%p925) target = $region120
        $region119: #{tpu_custom_call.1} parent=103 // pred_region
          %928 = dma.done %s921, 256
        $region120: #{tpu_custom_call.1} parent=103 // pred_fallthru
          _
        %s929 = sand.u32 %s54, 1
        %s930 = scalar_lea.sflag [#allocation12], %s929
        %s931 = sand.u32 %s222, 1
        %s932 = smul.addr %s931, 16
        %s933 = scalar_lea.vmem [#allocation13], %s932
        // Predicated region
        $region121: #{tpu_custom_call.1} parent=103 // pred_check
          %p934 = pneg %p235
        $region122: #{tpu_custom_call.1} parent=103 // pred_check_branch
          %936 = sbr.rel (%p934) target = $region124
        $region123: #{tpu_custom_call.1} parent=103 // pred_region
          %937 = dma.done %s930, 256
        $region124: #{tpu_custom_call.1} parent=103 // pred_fallthru
          _
        %s938 = sand.u32 %s54, 1
        %s939 = scalar_lea.sflag [#allocation15], %s938
        %s940 = sand.u32 %s248, 1
        %s941 = scalar_lea.vmem [#allocation14], %s940
        // Predicated region
        $region125: #{tpu_custom_call.1} parent=103 // pred_check
          %p942 = pneg %p261
        $region126: #{tpu_custom_call.1} parent=103 // pred_check_branch
          %944 = sbr.rel (%p942) target = $region128
        $region127: #{tpu_custom_call.1} parent=103 // pred_region
          %945 = dma.done %s939, 16
        $region128: #{tpu_custom_call.1} parent=103 // pred_fallthru
          _
        %s946 = sand.u32 %s54, 1
        %s947 = scalar_lea.sflag [#allocation15], %s946
        %s948 = sand.u32 %s274, 1
        %s949 = scalar_lea.vmem [#allocation16], %s948
        // Predicated region
        $region129: #{tpu_custom_call.1} parent=103 // pred_check
          %p950 = pneg %p287
        $region130: #{tpu_custom_call.1} parent=103 // pred_check_branch
          %952 = sbr.rel (%p950) target = $region132
        $region131: #{tpu_custom_call.1} parent=103 // pred_region
          %953 = dma.done %s947, 16
        $region132: #{tpu_custom_call.1} parent=103 // pred_fallthru
          _
        %s954 = sand.u32 %s54, 1
        %s955 = scalar_lea.sflag [#allocation18], %s954
        %s956 = sand.u32 %s326, 1
        %s957 = smul.addr %s956, 48
        %s958 = scalar_lea.vmem [#allocation17], %s957
        // Predicated region
        $region133: #{tpu_custom_call.1} parent=103 // pred_check
          %p959 = pneg %p339
        $region134: #{tpu_custom_call.1} parent=103 // pred_check_branch
          %961 = sbr.rel (%p959) target = $region136
        $region135: #{tpu_custom_call.1} parent=103 // pred_region
          %962 = dma.done %s955, 768
        $region136: #{tpu_custom_call.1} parent=103 // pred_fallthru
          _
        %s963 = sand.u32 %s54, 1
        %s964 = scalar_lea.sflag [#allocation18], %s963
        %s965 = sand.u32 %s352, 1
        %s966 = scalar_lea.vmem [#allocation19], %s965
        // Predicated region
        $region137: #{tpu_custom_call.1} parent=103 // pred_check
          %p967 = pneg %p365
        $region138: #{tpu_custom_call.1} parent=103 // pred_check_branch
          %969 = sbr.rel (%p967) target = $region140
        $region139: #{tpu_custom_call.1} parent=103 // pred_region
          %970 = dma.done %s964, 16
        $region140: #{tpu_custom_call.1} parent=103 // pred_fallthru
          _
        %s971 = sand.u32 %s54, 1
        %s972 = scalar_lea.sflag [#allocation21], %s971
        %s973 = sand.u32 %s378, 1
        %s974 = scalar_lea.vmem [#allocation20], %s973
        // Predicated region
        $region141: #{tpu_custom_call.1} parent=103 // pred_check
          %p975 = pneg %p391
        $region142: #{tpu_custom_call.1} parent=103 // pred_check_branch
          %977 = sbr.rel (%p975) target = $region144
        $region143: #{tpu_custom_call.1} parent=103 // pred_region
          %978 = dma.done %s972, 16
        $region144: #{tpu_custom_call.1} parent=103 // pred_fallthru
          _
        %s979 = sand.u32 %s54, 1
        %s980 = scalar_lea.sflag [#allocation21], %s979
        %s981 = sand.u32 %s430, 1
        %s982 = smul.addr %s981, 16
        %s983 = scalar_lea.vmem [#allocation22], %s982
        // Predicated region
        $region145: #{tpu_custom_call.1} parent=103 // pred_check
          %p984 = pneg %p443
        $region146: #{tpu_custom_call.1} parent=103 // pred_check_branch
          %986 = sbr.rel (%p984) target = $region148
        $region147: #{tpu_custom_call.1} parent=103 // pred_region
          %987 = dma.done %s980, 256
        $region148: #{tpu_custom_call.1} parent=103 // pred_fallthru
          _
        %s988 = sand.u32 %s54, 1
        %s989 = scalar_lea.sflag [#allocation24], %s988
        %s990 = sand.u32 %s456, 1
        %s991 = scalar_lea.vmem [#allocation23], %s990
        // Predicated region
        $region149: #{tpu_custom_call.1} parent=103 // pred_check
          %p992 = pneg %p469
        $region150: #{tpu_custom_call.1} parent=103 // pred_check_branch
          %994 = sbr.rel (%p992) target = $region152
        $region151: #{tpu_custom_call.1} parent=103 // pred_region
          %995 = dma.done %s989, 16
        $region152: #{tpu_custom_call.1} parent=103 // pred_fallthru
          _
        %s996 = sand.u32 %s54, 1
        %s997 = scalar_lea.sflag [#allocation24], %s996
        %s998 = sand.u32 %s482, 1
        %s999 = scalar_lea.vmem [#allocation25], %s998
        // Predicated region
        $region153: #{tpu_custom_call.1} parent=103 // pred_check
          %p1000 = pneg %p495
        $region154: #{tpu_custom_call.1} parent=103 // pred_check_branch
          %1002 = sbr.rel (%p1000) target = $region156
        $region155: #{tpu_custom_call.1} parent=103 // pred_region
          %1003 = dma.done %s997, 16
        $region156: #{tpu_custom_call.1} parent=103 // pred_fallthru
          _
        %p1004 = scmp.lt.s32.totalorder %s58, 1
        %s1005 = scalar_select %p1004, %s58, 1
        %s1006 = smul.addr %s1005, 2
        %s1007 = smul.addr %s1006, 8
        %s1008 = scalar_lea.vmem %s0, %s1007
        %p1009 = pneg %p87
        %p1010 = pneg %p84
        %p1011 = scmp.lt.s32.totalorder %s58, 1
        %s1012 = scalar_select %p1011, %s58, 1
        %s1013 = smul.addr %s1012, 4
        %s1014 = smul.addr %s1013, 8
        %s1015 = scalar_lea.vmem %s1, %s1014
        %p1016 = pneg %p113
        %p1017 = pneg %p110
        %s1018 = sand.u32 %s128, 1
        %s1019 = scalar_lea.sflag [#allocation6], %s1018
        %s1020 = sand.u32 %s128, 1
        %s1021 = scalar_lea.vmem [#allocation5], %s1020
        %p1022 = pneg %p141
        %p1023 = pneg %p138
        %p1024 = pneg %p162
        %p1025 = pneg %p159
        %p1026 = pneg %p183
        %p1027 = pneg %p180
        %s1028 = sand.u32 %s54, 1
        %s1029 = scalar_lea.sflag [#allocation12], %s1028
        %s1030 = sand.u32 %s196, 1
        %s1031 = smul.addr %s1030, 16
        %s1032 = scalar_lea.vmem [#allocation11], %s1031
        %p1033 = pneg %p209
        %p1034 = pneg %p206
        %s1035 = sand.u32 %s54, 1
        %s1036 = scalar_lea.sflag [#allocation12], %s1035
        %s1037 = sand.u32 %s222, 1
        %s1038 = smul.addr %s1037, 16
        %s1039 = scalar_lea.vmem [#allocation13], %s1038
        %p1040 = pneg %p235
        %p1041 = pneg %p232
        %s1042 = sand.u32 %s54, 1
        %s1043 = scalar_lea.sflag [#allocation15], %s1042
        %s1044 = sand.u32 %s248, 1
        %s1045 = scalar_lea.vmem [#allocation14], %s1044
        %p1046 = pneg %p261
        %p1047 = pneg %p258
        %s1048 = sand.u32 %s54, 1
        %s1049 = scalar_lea.sflag [#allocation15], %s1048
        %s1050 = sand.u32 %s274, 1
        %s1051 = scalar_lea.vmem [#allocation16], %s1050
        %p1052 = pneg %p287
        %p1053 = pneg %p284
        %p1054 = scmp.lt.s32.totalorder %s59, 1
        %s1055 = scalar_select %p1054, %s59, 1
        %s1056 = smul.addr %s1055, 12
        %s1057 = smul.addr %s1056, 4
        %s1058 = scalar_lea.vmem %s9, %s1057
        %p1059 = pneg %p313
        %p1060 = pneg %p310
        %s1061 = sand.u32 %s54, 1
        %s1062 = scalar_lea.sflag [#allocation18], %s1061
        %s1063 = sand.u32 %s326, 1
        %s1064 = smul.addr %s1063, 48
        %s1065 = scalar_lea.vmem [#allocation17], %s1064
        %p1066 = pneg %p339
        %p1067 = pneg %p336
        %s1068 = sand.u32 %s54, 1
        %s1069 = scalar_lea.sflag [#allocation18], %s1068
        %s1070 = sand.u32 %s352, 1
        %s1071 = scalar_lea.vmem [#allocation19], %s1070
        %p1072 = pneg %p365
        %p1073 = pneg %p362
        %s1074 = sand.u32 %s54, 1
        %s1075 = scalar_lea.sflag [#allocation21], %s1074
        %s1076 = sand.u32 %s378, 1
        %s1077 = scalar_lea.vmem [#allocation20], %s1076
        %p1078 = pneg %p391
        %p1079 = pneg %p388
        %p1080 = scmp.lt.s32.totalorder %s59, 1
        %s1081 = scalar_select %p1080, %s59, 1
        %s1082 = smul.addr %s1081, 4
        %s1083 = smul.addr %s1082, 4
        %s1084 = scalar_lea.vmem %s13, %s1083
        %p1085 = pneg %p417
        %p1086 = pneg %p414
        %s1087 = sand.u32 %s54, 1
        %s1088 = scalar_lea.sflag [#allocation21], %s1087
        %s1089 = sand.u32 %s430, 1
        %s1090 = smul.addr %s1089, 16
        %s1091 = scalar_lea.vmem [#allocation22], %s1090
        %p1092 = pneg %p443
        %p1093 = pneg %p440
        %s1094 = sand.u32 %s54, 1
        %s1095 = scalar_lea.sflag [#allocation24], %s1094
        %s1096 = sand.u32 %s456, 1
        %s1097 = scalar_lea.vmem [#allocation23], %s1096
        %p1098 = pneg %p469
        %p1099 = pneg %p466
        %s1100 = sand.u32 %s54, 1
        %s1101 = scalar_lea.sflag [#allocation24], %s1100
        %s1102 = sand.u32 %s482, 1
        %s1103 = scalar_lea.vmem [#allocation25], %s1102
        %p1104 = pneg %p495
        %p1105 = pneg %p492
        %p1106 = pneg %p516
        %p1107 = pneg %p513
        %p1108 = pneg %p537
        %p1109 = pneg %p534
        %p1110 = pneg %p558
        %p1111 = pneg %p555
        %p1112 = pneg %p579
        %p1113 = pneg %p576
        %p1114 = pneg %p605
        %p1115 = pneg %p602
        %s1116 = sand.u32 %s592, 1
        %s1117 = scalar_lea.sflag [#allocation7], %s1116
        %s1118 = sand.u32 %s592, 1
        %s1119 = smul.addr %s1118, 16
        %s1120 = scalar_lea.vmem [#allocation26], %s1119
        %p1121 = scmp.lt.s32.totalorder %s58, 1
        %s1122 = scalar_select %p1121, %s58, 1
        %s1123 = smul.addr %s1122, 2
        %s1124 = smul.addr %s1123, 8
        %s1125 = scalar_lea.vmem %s0, %s1124
        %p1126 = scmp.lt.s32.totalorder %s58, 1
        %s1127 = scalar_select %p1126, %s58, 1
        %s1128 = smul.addr %s1127, 4
        %s1129 = smul.addr %s1128, 8
        %s1130 = scalar_lea.vmem %s1, %s1129
        %p1131 = scmp.lt.s32.totalorder %s59, 1
        %s1132 = scalar_select %p1131, %s59, 1
        %s1133 = smul.addr %s1132, 12
        %s1134 = smul.addr %s1133, 4
        %s1135 = scalar_lea.vmem %s9, %s1134
        %p1136 = scmp.lt.s32.totalorder %s59, 1
        %s1137 = scalar_select %p1136, %s59, 1
        %s1138 = smul.addr %s1137, 4
        %s1139 = smul.addr %s1138, 4
        %s1140 = scalar_lea.vmem %s13, %s1139
        %p1142 = scmp.eq.s32.totalorder %s59, 0
        // Predicated region
        $region157: #{tpu_custom_call.1} parent=103 // pred_check
          %p1143 = pneg %p1142
        $region158: #{tpu_custom_call.1} parent=103 // pred_check_branch
          %1145 = sbr.rel (%p1143) target = $region160
        $region159: #{tpu_custom_call.1} parent=103 // pred_region
          %v1146 = vld [vmem:[%s1125] sm:$0xff]
          %v1147 = vld [vmem:[%s1125 + $0x8] sm:$0xff]
          %1148 = vxpose.xlu0.b32.start [1/16] %v1146, 128
          %1149 = vxpose.xlu0.b32.cont [2/16] %v1147, 128
          %1150 = vxpose.xlu0.b32.cont [3/16] 0.0, 128
          %1151 = vxpose.xlu0.b32.cont [4/16] 0.0, 128
          %1152 = vxpose.xlu0.b32.cont [5/16] 0.0, 128
          %1153 = vxpose.xlu0.b32.cont [6/16] 0.0, 128
          %1154 = vxpose.xlu0.b32.cont [7/16] 0.0, 128
          %1155 = vxpose.xlu0.b32.cont [8/16] 0.0, 128
          %1156 = vxpose.xlu0.b32.cont [9/16] 0.0, 128
          %1157 = vxpose.xlu0.b32.cont [10/16] 0.0, 128
          %1158 = vxpose.xlu0.b32.cont [11/16] 0.0, 128
          %1159 = vxpose.xlu0.b32.cont [12/16] 0.0, 128
          %1160 = vxpose.xlu0.b32.cont [13/16] 0.0, 128
          %1161 = vxpose.xlu0.b32.cont [14/16] 0.0, 128
          %1162 = vxpose.xlu0.b32.cont [15/16] 0.0, 128
          %1163 = vxpose.xlu0.b32.end [16/16] 0.0, 128
          %v1164 = vpop.trf.xlu0
          %v1165 = vpop.trf.xlu0
          %v1166 = vpop.trf.xlu0
          %v1167 = vpop.trf.xlu0
          %v1168 = vpop.trf.xlu0
          %v1169 = vpop.trf.xlu0
          %v1170 = vpop.trf.xlu0
          %v1171 = vpop.trf.xlu0
          %v1172 = vpop.trf.xlu0
          %v1173 = vpop.trf.xlu0
          %v1174 = vpop.trf.xlu0
          %v1175 = vpop.trf.xlu0
          %v1176 = vpop.trf.xlu0
          %v1177 = vpop.trf.xlu0
          %v1178 = vpop.trf.xlu0
          %v1179 = vpop.trf.xlu0
          %v1180 = vpack.c.bf16 %v1165, %v1164
          %v1181 = vld [vmem:[#allocation8] sm:$0xf]
          %v1182 = vld [vmem:[#allocation8 + $0x4] sm:$0xf]
          %v1183 = vld [vmem:[#allocation10] sm:$0x1]
          %v1185 = vlaneseq
          %v1186 = vshrl.u32 %v1185, 7
          %v1187 = vsub.s32 0, %v1186
          %v1188 = vrot.slane %v1183, %v1187
          %v1192 = vunpack.c.l.b16 %v1181
          %v1193 = vunpack.c.l.b16 %v1182
          %v1194 = vpack.c.b16 %v1193, %v1192
          %vm1196 = vcmask 130048
          %v1198 = vsel %vm1196, %v1180, 0
          %1200 = vmatprep.subr.bf16.mxu0 0
          %1201 = vmatpush1.bf16.msra.mxu0 %v1194
          %1202 = vmatprep.subr.bf16.mxu0 0
          %1203 = vmatpush1.bf16.msra.mxu0 0
          %1204 = vmatprep.subr.bf16.mxu0 0
          %1205 = vmatpush1.bf16.msra.mxu0 0
          %1206 = vmatprep.subr.bf16.mxu0 0
          %1207 = vmatpush1.bf16.msra.mxu0 0
          %1208 = vmatprep.subr.bf16.mxu0 0
          %1209 = vmatpush1.bf16.msra.mxu0 0
          %1210 = vmatprep.subr.bf16.mxu0 0
          %1211 = vmatpush1.bf16.msra.mxu0 0
          %1212 = vmatprep.subr.bf16.mxu0 0
          %1213 = vmatpush1.bf16.msra.mxu0 0
          %1214 = vmatprep.subr.bf16.mxu0 0
          %1215 = vmatpush1.bf16.msra.mxu0 0
          %1216 = vmatprep.subr.bf16.mxu0 0
          %1217 = vmatpush1.bf16.msra.mxu0 0
          %1218 = vmatprep.subr.bf16.mxu0 0
          %1219 = vmatpush1.bf16.msra.mxu0 0
          %1220 = vmatprep.subr.bf16.mxu0 0
          %1221 = vmatpush1.bf16.msra.mxu0 0
          %1222 = vmatprep.subr.bf16.mxu0 0
          %1223 = vmatpush1.bf16.msra.mxu0 0
          %1224 = vmatprep.subr.bf16.mxu0 0
          %1225 = vmatpush1.bf16.msra.mxu0 0
          %1226 = vmatprep.subr.bf16.mxu0 0
          %1227 = vmatpush1.bf16.msra.mxu0 0
          %1228 = vmatprep.subr.bf16.mxu0 0
          %1229 = vmatpush1.bf16.msra.mxu0 0
          %1230 = vmatprep.subr.bf16.mxu0 0
          %1231 = vmatpush1.bf16.msra.mxu0 0
          %1232 = vmatprep.mubr.bf16.mxu0 0
          %1233 = vmatmul.mubr.bf16.gmra.mrb[0].mxu0 %v1198
          %v1234 = vpop.f32.mrb[0].mxu0
          %v1235 = vadd.f32 %v1188, %v1234
          %v1236 = vpop.f32.mrb[0].mxu0
          %v1237 = vpop.f32.mrb[0].mxu0
          %v1238 = vadd.f32 %v1188, %v1237
          %v1239 = vpop.f32.mrb[0].mxu0
          %1240 = vdwg.mxu0
          %v1241 = vmax.f32 %v1235, 0.0
          %v1242 = vmax.f32 %v1238, 0.0
          %v1243 = vand.u32 2147483647, %v1235
          %v1244 = vand.u32 2147483647, %v1238
          %v1245 = vsub.f32 0.0, %v1243
          %v1246 = vsub.f32 0.0, %v1244
          %v1247 = vmul.f32 %v1245, 1.442695
          %v1248 = vpow.pop %v1247
          %v1249 = vmul.f32 %v1246, 1.442695
          %v1250 = vpow.pop %v1249
          %v1251 = vadd.f32 %v1248, 1.0
          %v1252 = vlog2.pop %v1251
          %v1253 = vmul.f32 %v1252, 0.6931472
          %v1254 = vmul.f32 -0.5, %v1248
          %v1255 = vadd.f32 %v1254, 1.0
          %v1256 = vmul.f32 %v1255, %v1248
          %v1257 = vand.u32 2147483647, %v1248
          %vm1258 = vcmp.lt.f32.partialorder %v1257, 0.0004427343
          %v1259 = vsel %vm1258, %v1256, %v1253
          %v1260 = vadd.f32 %v1250, 1.0
          %v1261 = vlog2.pop %v1260
          %v1262 = vmul.f32 %v1261, 0.6931472
          %v1263 = vmul.f32 -0.5, %v1250
          %v1264 = vadd.f32 %v1263, 1.0
          %v1265 = vmul.f32 %v1264, %v1250
          %v1266 = vand.u32 2147483647, %v1250
          %vm1267 = vcmp.lt.f32.partialorder %v1266, 0.0004427343
          %v1268 = vsel %vm1267, %v1265, %v1262
          %v1269 = vadd.f32 %v1241, %v1259
          %v1270 = vadd.f32 %v1242, %v1268
          %v1271 = vtanh.pop %v1269
          %v1272 = vtanh.pop %v1270
          %v1273 = vmul.f32 %v1235, %v1271
          %v1274 = vmul.f32 %v1238, %v1272
          %vm1275 = vcmask 261120
          %1276 = vst.msk [vmem:[#allocation2] sm:$0xff] %vm1275, %v1273
          %1277 = vst.msk [vmem:[#allocation2 + $0x8] sm:$0xff] %vm1275, %v1274
          %1278 = vst.msk [vmem:[#allocation3] sm:$0xff] %vm1275, 0.0
          %1279 = vst.msk [vmem:[#allocation3 + $0x8] sm:$0xff] %vm1275, 0.0
          %v1280 = vld [vmem:[%s1130] sm:$0xff]
          %v1281 = vld [vmem:[%s1130 + $0x8] sm:$0xff]
          %v1282 = vld [vmem:[%s1130 + $0x10] sm:$0xff]
          %v1283 = vld [vmem:[%s1130 + $0x18] sm:$0xff]
          %1284 = vxpose.xlu0.b32.start [1/16] %v1280, 128
          %1285 = vxpose.xlu0.b32.cont [2/16] %v1281, 128
          %1286 = vxpose.xlu0.b32.cont [3/16] %v1282, 128
          %1287 = vxpose.xlu0.b32.cont [4/16] %v1283, 128
          %1288 = vxpose.xlu0.b32.cont [5/16] 0.0, 128
          %1289 = vxpose.xlu0.b32.cont [6/16] 0.0, 128
          %1290 = vxpose.xlu0.b32.cont [7/16] 0.0, 128
          %1291 = vxpose.xlu0.b32.cont [8/16] 0.0, 128
          %1292 = vxpose.xlu0.b32.cont [9/16] 0.0, 128
          %1293 = vxpose.xlu0.b32.cont [10/16] 0.0, 128
          %1294 = vxpose.xlu0.b32.cont [11/16] 0.0, 128
          %1295 = vxpose.xlu0.b32.cont [12/16] 0.0, 128
          %1296 = vxpose.xlu0.b32.cont [13/16] 0.0, 128
          %1297 = vxpose.xlu0.b32.cont [14/16] 0.0, 128
          %1298 = vxpose.xlu0.b32.cont [15/16] 0.0, 128
          %1299 = vxpose.xlu0.b32.end [16/16] 0.0, 128
          %v1300 = vpop.trf.xlu0
          %v1301 = vpop.trf.xlu0
          %v1302 = vpop.trf.xlu0
          %v1303 = vpop.trf.xlu0
          %v1304 = vpop.trf.xlu0
          %v1305 = vpop.trf.xlu0
          %v1306 = vpop.trf.xlu0
          %v1307 = vpop.trf.xlu0
          %v1308 = vpop.trf.xlu0
          %v1309 = vpop.trf.xlu0
          %v1310 = vpop.trf.xlu0
          %v1311 = vpop.trf.xlu0
          %v1312 = vpop.trf.xlu0
          %v1313 = vpop.trf.xlu0
          %v1314 = vpop.trf.xlu0
          %v1315 = vpop.trf.xlu0
          %v1316 = vpack.c.bf16 %v1301, %v1300
          %1317 = vst.msk [vmem:[#allocation4] sm:$0xff] %vm1275, %v1316
        $region160: #{tpu_custom_call.1} parent=103 // pred_fallthru
          _
        %v1318 = vld [vmem:[#allocation2] sm:$0xff]
        %v1319 = vld [vmem:[#allocation2 + $0x8] sm:$0xff]
        %v1320 = vld [vmem:[#allocation4] sm:$0xff]
        %v1321 = vld [vmem:[%s907] sm:$0x1]
        %v1323 = vlaneseq
        %v1324 = vshrl.u32 %v1323, 7
        %v1325 = vsub.s32 0, %v1324
        %v1326 = vrot.slane %v1321, %v1325
        %v1328 = vadd.f32 %v1318, %v1326
        %v1329 = vadd.f32 %v1319, %v1326
        %vm1332 = vcmask 1040384
        %v1333 = vrot.slane %v1328, 7
        %v1334 = vrot.slane %v1329, 7
        %v1335 = vsel %vm1332, %v1333, %v1334
        %v1339 = vsel %vm1332, 0.0, %v1333
        %v1340 = vsel %vm1332, %v1334, 0.0
        %v1341 = vpack.c.bf16 %v1335, %v1339
        %v1342 = vpack.c.bf16 %v1340, %v1340
        %v1343 = vld [vmem:[%s1135] sm:$0xf]
        %v1344 = vld [vmem:[%s1135 + $0x4] sm:$0xf]
        %v1345 = vld [vmem:[%s1135 + $0x8] sm:$0xf]
        %v1346 = vld [vmem:[%s1135 + $0xc] sm:$0xf]
        %v1347 = vld [vmem:[%s1135 + $0x10] sm:$0xf]
        %v1348 = vld [vmem:[%s1135 + $0x14] sm:$0xf]
        %v1349 = vld [vmem:[%s1135 + $0x18] sm:$0xf]
        %v1350 = vld [vmem:[%s1135 + $0x1c] sm:$0xf]
        %v1351 = vld [vmem:[%s1135 + $0x20] sm:$0xf]
        %v1352 = vld [vmem:[%s1135 + $0x24] sm:$0xf]
        %v1353 = vld [vmem:[%s1135 + $0x28] sm:$0xf]
        %v1354 = vld [vmem:[%s1135 + $0x2c] sm:$0xf]
        %v1355 = vld [vmem:[%s958] sm:$0xf]
        %v1356 = vld [vmem:[%s958 + $0x4] sm:$0xf]
        %v1357 = vld [vmem:[%s958 + $0x8] sm:$0xf]
        %v1358 = vld [vmem:[%s958 + $0xc] sm:$0xf]
        %v1359 = vld [vmem:[%s958 + $0x10] sm:$0xf]
        %v1360 = vld [vmem:[%s958 + $0x14] sm:$0xf]
        %v1361 = vld [vmem:[%s958 + $0x18] sm:$0xf]
        %v1362 = vld [vmem:[%s958 + $0x1c] sm:$0xf]
        %v1363 = vld [vmem:[%s958 + $0x20] sm:$0xf]
        %v1364 = vld [vmem:[%s958 + $0x24] sm:$0xf]
        %v1365 = vld [vmem:[%s958 + $0x28] sm:$0xf]
        %v1366 = vld [vmem:[%s958 + $0x2c] sm:$0xf]
        %v1367 = vld [vmem:[%s966] sm:$0x1]
        %v1368 = vld [vmem:[%s941] sm:$0x1]
        %v1369 = vadd.f32 %v1367, %v1368
        %v1370 = vld [vmem:[%s924] sm:$0xf]
        %v1371 = vld [vmem:[%s924 + $0x4] sm:$0xf]
        %v1372 = vld [vmem:[%s924 + $0x8] sm:$0xf]
        %v1373 = vld [vmem:[%s924 + $0xc] sm:$0xf]
        %v1378 = vunpack.c.l.b16 %v1370
        %v1379 = vunpack.c.l.b16 %v1371
        %v1380 = vunpack.c.l.b16 %v1372
        %v1381 = vunpack.c.l.b16 %v1373
        %v1382 = vpack.c.b16 %v1379, %v1378
        %v1383 = vpack.c.b16 %v1381, %v1380
        %vm1386 = vcmask 261120
        %v1388 = vsel %vm1386, %v1320, 0
        %1390 = vmatprep.subr.bf16.mxu0 0
        %1391 = vmatpush1.bf16.msra.mxu0 %v1382
        %1392 = vmatprep.subr.bf16.mxu0 0
        %1393 = vmatpush1.bf16.msra.mxu0 %v1383
        %1394 = vmatprep.subr.bf16.mxu0 0
        %1395 = vmatpush1.bf16.msra.mxu0 0
        %1396 = vmatprep.subr.bf16.mxu0 0
        %1397 = vmatpush1.bf16.msra.mxu0 0
        %1398 = vmatprep.subr.bf16.mxu0 0
        %1399 = vmatpush1.bf16.msra.mxu0 0
        %1400 = vmatprep.subr.bf16.mxu0 0
        %1401 = vmatpush1.bf16.msra.mxu0 0
        %1402 = vmatprep.subr.bf16.mxu0 0
        %1403 = vmatpush1.bf16.msra.mxu0 0
        %1404 = vmatprep.subr.bf16.mxu0 0
        %1405 = vmatpush1.bf16.msra.mxu0 0
        %1406 = vmatprep.subr.bf16.mxu0 0
        %1407 = vmatpush1.bf16.msra.mxu0 0
        %1408 = vmatprep.subr.bf16.mxu0 0
        %1409 = vmatpush1.bf16.msra.mxu0 0
        %1410 = vmatprep.subr.bf16.mxu0 0
        %1411 = vmatpush1.bf16.msra.mxu0 0
        %1412 = vmatprep.subr.bf16.mxu0 0
        %1413 = vmatpush1.bf16.msra.mxu0 0
        %1414 = vmatprep.subr.bf16.mxu0 0
        %1415 = vmatpush1.bf16.msra.mxu0 0
        %1416 = vmatprep.subr.bf16.mxu0 0
        %1417 = vmatpush1.bf16.msra.mxu0 0
        %1418 = vmatprep.subr.bf16.mxu0 0
        %1419 = vmatpush1.bf16.msra.mxu0 0
        %1420 = vmatprep.subr.bf16.mxu0 0
        %1421 = vmatpush1.bf16.msra.mxu0 0
        %1422 = vmatprep.mubr.bf16.mxu0 0
        %1423 = vmatmul.mubr.bf16.gmra.mrb[0].mxu0 %v1388
        %v1424 = vpop.f32.mrb[0].mxu0
        %v1425 = vadd.f32 0.0, %v1424
        %v1426 = vpop.f32.mrb[0].mxu0
        %v1427 = vpop.f32.mrb[0].mxu0
        %v1428 = vadd.f32 0.0, %v1427
        %v1429 = vpop.f32.mrb[0].mxu0
        %1430 = vdwg.mxu0
        %v1432 = vlaneseq
        %v1433 = vshrl.u32 %v1432, 7
        %v1434 = vsub.s32 0, %v1433
        %v1435 = vrot.slane %v1369, %v1434
        %v1437 = vadd.f32 %v1435, %v1425
        %v1438 = vadd.f32 %v1435, %v1428
        %v1439 = vld [vmem:[%s974] sm:$0x1]
        %v1440 = vld [vmem:[%s949] sm:$0x1]
        %v1441 = vadd.f32 %v1439, %v1440
        %v1442 = vld [vmem:[%s933] sm:$0xf]
        %v1443 = vld [vmem:[%s933 + $0x4] sm:$0xf]
        %v1444 = vld [vmem:[%s933 + $0x8] sm:$0xf]
        %v1445 = vld [vmem:[%s933 + $0xc] sm:$0xf]
        %v1450 = vunpack.c.l.b16 %v1442
        %v1451 = vunpack.c.l.b16 %v1443
        %v1452 = vunpack.c.l.b16 %v1444
        %v1453 = vunpack.c.l.b16 %v1445
        %v1454 = vpack.c.b16 %v1451, %v1450
        %v1455 = vpack.c.b16 %v1453, %v1452
        %1458 = vmatprep.subr.bf16.mxu0 0
        %1459 = vmatpush1.bf16.msra.mxu0 %v1454
        %1460 = vmatprep.subr.bf16.mxu0 0
        %1461 = vmatpush1.bf16.msra.mxu0 %v1455
        %1462 = vmatprep.subr.bf16.mxu0 0
        %1463 = vmatpush1.bf16.msra.mxu0 0
        %1464 = vmatprep.subr.bf16.mxu0 0
        %1465 = vmatpush1.bf16.msra.mxu0 0
        %1466 = vmatprep.subr.bf16.mxu0 0
        %1467 = vmatpush1.bf16.msra.mxu0 0
        %1468 = vmatprep.subr.bf16.mxu0 0
        %1469 = vmatpush1.bf16.msra.mxu0 0
        %1470 = vmatprep.subr.bf16.mxu0 0
        %1471 = vmatpush1.bf16.msra.mxu0 0
        %1472 = vmatprep.subr.bf16.mxu0 0
        %1473 = vmatpush1.bf16.msra.mxu0 0
        %1474 = vmatprep.subr.bf16.mxu0 0
        %1475 = vmatpush1.bf16.msra.mxu0 0
        %1476 = vmatprep.subr.bf16.mxu0 0
        %1477 = vmatpush1.bf16.msra.mxu0 0
        %1478 = vmatprep.subr.bf16.mxu0 0
        %1479 = vmatpush1.bf16.msra.mxu0 0
        %1480 = vmatprep.subr.bf16.mxu0 0
        %1481 = vmatpush1.bf16.msra.mxu0 0
        %1482 = vmatprep.subr.bf16.mxu0 0
        %1483 = vmatpush1.bf16.msra.mxu0 0
        %1484 = vmatprep.subr.bf16.mxu0 0
        %1485 = vmatpush1.bf16.msra.mxu0 0
        %1486 = vmatprep.subr.bf16.mxu0 0
        %1487 = vmatpush1.bf16.msra.mxu0 0
        %1488 = vmatprep.subr.bf16.mxu0 0
        %1489 = vmatpush1.bf16.msra.mxu0 0
        %1490 = vmatprep.mubr.bf16.mxu0 0
        %1491 = vmatmul.mubr.bf16.gmra.mrb[0].mxu0 %v1388
        %v1492 = vpop.f32.mrb[0].mxu0
        %v1493 = vadd.f32 0.0, %v1492
        %v1494 = vpop.f32.mrb[0].mxu0
        %v1495 = vpop.f32.mrb[0].mxu0
        %v1496 = vadd.f32 0.0, %v1495
        %v1497 = vpop.f32.mrb[0].mxu0
        %1498 = vdwg.mxu0
        %v1500 = vlaneseq
        %v1501 = vshrl.u32 %v1500, 7
        %v1502 = vsub.s32 0, %v1501
        %v1503 = vrot.slane %v1441, %v1502
        %v1505 = vadd.f32 %v1503, %v1493
        %v1506 = vadd.f32 %v1503, %v1496
        %v1511 = vunpack.c.l.b16 %v1343
        %v1512 = vunpack.c.l.b16 %v1344
        %v1513 = vunpack.c.l.b16 %v1345
        %v1514 = vunpack.c.l.b16 %v1346
        %v1515 = vpack.c.b16 %v1512, %v1511
        %v1516 = vpack.c.b16 %v1514, %v1513
        %v1520 = vsel %vm1386, %v1341, 0
        %1522 = vmatprep.subr.bf16.mxu0 0
        %1523 = vmatpush1.bf16.msra.mxu0 %v1515
        %1524 = vmatprep.subr.bf16.mxu0 0
        %1525 = vmatpush1.bf16.msra.mxu0 %v1516
        %1526 = vmatprep.subr.bf16.mxu0 0
        %1527 = vmatpush1.bf16.msra.mxu0 0
        %1528 = vmatprep.subr.bf16.mxu0 0
        %1529 = vmatpush1.bf16.msra.mxu0 0
        %1530 = vmatprep.subr.bf16.mxu0 0
        %1531 = vmatpush1.bf16.msra.mxu0 0
        %1532 = vmatprep.subr.bf16.mxu0 0
        %1533 = vmatpush1.bf16.msra.mxu0 0
        %1534 = vmatprep.subr.bf16.mxu0 0
        %1535 = vmatpush1.bf16.msra.mxu0 0
        %1536 = vmatprep.subr.bf16.mxu0 0
        %1537 = vmatpush1.bf16.msra.mxu0 0
        %1538 = vmatprep.subr.bf16.mxu0 0
        %1539 = vmatpush1.bf16.msra.mxu0 0
        %1540 = vmatprep.subr.bf16.mxu0 0
        %1541 = vmatpush1.bf16.msra.mxu0 0
        %1542 = vmatprep.subr.bf16.mxu0 0
        %1543 = vmatpush1.bf16.msra.mxu0 0
        %1544 = vmatprep.subr.bf16.mxu0 0
        %1545 = vmatpush1.bf16.msra.mxu0 0
        %1546 = vmatprep.subr.bf16.mxu0 0
        %1547 = vmatpush1.bf16.msra.mxu0 0
        %1548 = vmatprep.subr.bf16.mxu0 0
        %1549 = vmatpush1.bf16.msra.mxu0 0
        %1550 = vmatprep.subr.bf16.mxu0 0
        %1551 = vmatpush1.bf16.msra.mxu0 0
        %1552 = vmatprep.subr.bf16.mxu0 0
        %1553 = vmatpush1.bf16.msra.mxu0 0
        %1554 = vmatprep.mubr.bf16.mxu0 0
        %1555 = vmatmul.mubr.bf16.gmra.mrb[0].mxu0 %v1520
        %v1556 = vpop.f32.mrb[0].mxu0
        %v1557 = vadd.f32 0.0, %v1556
        %v1558 = vpop.f32.mrb[0].mxu0
        %v1559 = vpop.f32.mrb[0].mxu0
        %v1560 = vadd.f32 0.0, %v1559
        %v1561 = vpop.f32.mrb[0].mxu0
        %1562 = vdwg.mxu0
        %v1563 = vadd.f32 %v1437, %v1557
        %v1564 = vadd.f32 %v1438, %v1560
        %v1569 = vunpack.c.l.b16 %v1355
        %v1570 = vunpack.c.l.b16 %v1356
        %v1571 = vunpack.c.l.b16 %v1357
        %v1572 = vunpack.c.l.b16 %v1358
        %v1573 = vpack.c.b16 %v1570, %v1569
        %v1574 = vpack.c.b16 %v1572, %v1571
        %1577 = vmatprep.subr.bf16.mxu0 0
        %1578 = vmatpush1.bf16.msra.mxu0 %v1573
        %1579 = vmatprep.subr.bf16.mxu0 0
        %1580 = vmatpush1.bf16.msra.mxu0 %v1574
        %1581 = vmatprep.subr.bf16.mxu0 0
        %1582 = vmatpush1.bf16.msra.mxu0 0
        %1583 = vmatprep.subr.bf16.mxu0 0
        %1584 = vmatpush1.bf16.msra.mxu0 0
        %1585 = vmatprep.subr.bf16.mxu0 0
        %1586 = vmatpush1.bf16.msra.mxu0 0
        %1587 = vmatprep.subr.bf16.mxu0 0
        %1588 = vmatpush1.bf16.msra.mxu0 0
        %1589 = vmatprep.subr.bf16.mxu0 0
        %1590 = vmatpush1.bf16.msra.mxu0 0
        %1591 = vmatprep.subr.bf16.mxu0 0
        %1592 = vmatpush1.bf16.msra.mxu0 0
        %1593 = vmatprep.subr.bf16.mxu0 0
        %1594 = vmatpush1.bf16.msra.mxu0 0
        %1595 = vmatprep.subr.bf16.mxu0 0
        %1596 = vmatpush1.bf16.msra.mxu0 0
        %1597 = vmatprep.subr.bf16.mxu0 0
        %1598 = vmatpush1.bf16.msra.mxu0 0
        %1599 = vmatprep.subr.bf16.mxu0 0
        %1600 = vmatpush1.bf16.msra.mxu0 0
        %1601 = vmatprep.subr.bf16.mxu0 0
        %1602 = vmatpush1.bf16.msra.mxu0 0
        %1603 = vmatprep.subr.bf16.mxu0 0
        %1604 = vmatpush1.bf16.msra.mxu0 0
        %1605 = vmatprep.subr.bf16.mxu0 0
        %1606 = vmatpush1.bf16.msra.mxu0 0
        %1607 = vmatprep.subr.bf16.mxu0 0
        %1608 = vmatpush1.bf16.msra.mxu0 0
        %1609 = vmatprep.mubr.bf16.mxu0 0
        %1610 = vmatmul.mubr.bf16.gmra.mrb[0].mxu0 %v1520
        %v1611 = vpop.f32.mrb[0].mxu0
        %v1612 = vadd.f32 0.0, %v1611
        %v1613 = vpop.f32.mrb[0].mxu0
        %v1614 = vpop.f32.mrb[0].mxu0
        %v1615 = vadd.f32 0.0, %v1614
        %v1616 = vpop.f32.mrb[0].mxu0
        %1617 = vdwg.mxu0
        %v1618 = vadd.f32 %v1505, %v1612
        %v1619 = vadd.f32 %v1506, %v1615
        %vm1620 = vsmask.f32 7424
        %v1621 = vshrl.u32 %v1341, 16
        %v1623 = vshll.u32 %v1341, 16
        %v1625 = vrot.slane %v1623, 1
        %v1626 = vor.u32 %v1621, %v1625
        %v1628 = vshll.u32 %v1342, 16
        %v1630 = vrot.slane %v1628, 1
        %v1631 = vsel %vm1620, %v1626, %v1630
        %v1636 = vunpack.c.l.b16 %v1347
        %v1637 = vunpack.c.l.b16 %v1348
        %v1638 = vunpack.c.l.b16 %v1349
        %v1639 = vunpack.c.l.b16 %v1350
        %v1640 = vpack.c.b16 %v1637, %v1636
        %v1641 = vpack.c.b16 %v1639, %v1638
        %v1645 = vsel %vm1386, %v1631, 0
        %1647 = vmatprep.subr.bf16.mxu0 0
        %1648 = vmatpush1.bf16.msra.mxu0 %v1640
        %1649 = vmatprep.subr.bf16.mxu0 0
        %1650 = vmatpush1.bf16.msra.mxu0 %v1641
        %1651 = vmatprep.subr.bf16.mxu0 0
        %1652 = vmatpush1.bf16.msra.mxu0 0
        %1653 = vmatprep.subr.bf16.mxu0 0
        %1654 = vmatpush1.bf16.msra.mxu0 0
        %1655 = vmatprep.subr.bf16.mxu0 0
        %1656 = vmatpush1.bf16.msra.mxu0 0
        %1657 = vmatprep.subr.bf16.mxu0 0
        %1658 = vmatpush1.bf16.msra.mxu0 0
        %1659 = vmatprep.subr.bf16.mxu0 0
        %1660 = vmatpush1.bf16.msra.mxu0 0
        %1661 = vmatprep.subr.bf16.mxu0 0
        %1662 = vmatpush1.bf16.msra.mxu0 0
        %1663 = vmatprep.subr.bf16.mxu0 0
        %1664 = vmatpush1.bf16.msra.mxu0 0
        %1665 = vmatprep.subr.bf16.mxu0 0
        %1666 = vmatpush1.bf16.msra.mxu0 0
        %1667 = vmatprep.subr.bf16.mxu0 0
        %1668 = vmatpush1.bf16.msra.mxu0 0
        %1669 = vmatprep.subr.bf16.mxu0 0
        %1670 = vmatpush1.bf16.msra.mxu0 0
        %1671 = vmatprep.subr.bf16.mxu0 0
        %1672 = vmatpush1.bf16.msra.mxu0 0
        %1673 = vmatprep.subr.bf16.mxu0 0
        %1674 = vmatpush1.bf16.msra.mxu0 0
        %1675 = vmatprep.subr.bf16.mxu0 0
        %1676 = vmatpush1.bf16.msra.mxu0 0
        %1677 = vmatprep.subr.bf16.mxu0 0
        %1678 = vmatpush1.bf16.msra.mxu0 0
        %1679 = vmatprep.mubr.bf16.mxu0 0
        %1680 = vmatmul.mubr.bf16.gmra.mrb[0].mxu0 %v1645
        %v1681 = vpop.f32.mrb[0].mxu0
        %v1682 = vadd.f32 0.0, %v1681
        %v1683 = vpop.f32.mrb[0].mxu0
        %v1684 = vpop.f32.mrb[0].mxu0
        %v1685 = vadd.f32 0.0, %v1684
        %v1686 = vpop.f32.mrb[0].mxu0
        %1687 = vdwg.mxu0
        %v1688 = vadd.f32 %v1563, %v1682
        %v1689 = vadd.f32 %v1564, %v1685
        %v1694 = vunpack.c.l.b16 %v1359
        %v1695 = vunpack.c.l.b16 %v1360
        %v1696 = vunpack.c.l.b16 %v1361
        %v1697 = vunpack.c.l.b16 %v1362
        %v1698 = vpack.c.b16 %v1695, %v1694
        %v1699 = vpack.c.b16 %v1697, %v1696
        %1702 = vmatprep.subr.bf16.mxu0 0
        %1703 = vmatpush1.bf16.msra.mxu0 %v1698
        %1704 = vmatprep.subr.bf16.mxu0 0
        %1705 = vmatpush1.bf16.msra.mxu0 %v1699
        %1706 = vmatprep.subr.bf16.mxu0 0
        %1707 = vmatpush1.bf16.msra.mxu0 0
        %1708 = vmatprep.subr.bf16.mxu0 0
        %1709 = vmatpush1.bf16.msra.mxu0 0
        %1710 = vmatprep.subr.bf16.mxu0 0
        %1711 = vmatpush1.bf16.msra.mxu0 0
        %1712 = vmatprep.subr.bf16.mxu0 0
        %1713 = vmatpush1.bf16.msra.mxu0 0
        %1714 = vmatprep.subr.bf16.mxu0 0
        %1715 = vmatpush1.bf16.msra.mxu0 0
        %1716 = vmatprep.subr.bf16.mxu0 0
        %1717 = vmatpush1.bf16.msra.mxu0 0
        %1718 = vmatprep.subr.bf16.mxu0 0
        %1719 = vmatpush1.bf16.msra.mxu0 0
        %1720 = vmatprep.subr.bf16.mxu0 0
        %1721 = vmatpush1.bf16.msra.mxu0 0
        %1722 = vmatprep.subr.bf16.mxu0 0
        %1723 = vmatpush1.bf16.msra.mxu0 0
        %1724 = vmatprep.subr.bf16.mxu0 0
        %1725 = vmatpush1.bf16.msra.mxu0 0
        %1726 = vmatprep.subr.bf16.mxu0 0
        %1727 = vmatpush1.bf16.msra.mxu0 0
        %1728 = vmatprep.subr.bf16.mxu0 0
        %1729 = vmatpush1.bf16.msra.mxu0 0
        %1730 = vmatprep.subr.bf16.mxu0 0
        %1731 = vmatpush1.bf16.msra.mxu0 0
        %1732 = vmatprep.subr.bf16.mxu0 0
        %1733 = vmatpush1.bf16.msra.mxu0 0
        %1734 = vmatprep.mubr.bf16.mxu0 0
        %1735 = vmatmul.mubr.bf16.gmra.mrb[0].mxu0 %v1645
        %v1736 = vpop.f32.mrb[0].mxu0
        %v1737 = vadd.f32 0.0, %v1736
        %v1738 = vpop.f32.mrb[0].mxu0
        %v1739 = vpop.f32.mrb[0].mxu0
        %v1740 = vadd.f32 0.0, %v1739
        %v1741 = vpop.f32.mrb[0].mxu0
        %1742 = vdwg.mxu0
        %v1743 = vadd.f32 %v1618, %v1737
        %v1744 = vadd.f32 %v1619, %v1740
        %vm1747 = vcmask 1046528
        %v1748 = vrot.slane %v1341, 1
        %v1749 = vrot.slane %v1342, 1
        %v1750 = vsel %vm1747, %v1748, %v1749
        %v1755 = vunpack.c.l.b16 %v1351
        %v1756 = vunpack.c.l.b16 %v1352
        %v1757 = vunpack.c.l.b16 %v1353
        %v1758 = vunpack.c.l.b16 %v1354
        %v1759 = vpack.c.b16 %v1756, %v1755
        %v1760 = vpack.c.b16 %v1758, %v1757
        %v1764 = vsel %vm1386, %v1750, 0
        %1766 = vmatprep.subr.bf16.mxu0 0
        %1767 = vmatpush1.bf16.msra.mxu0 %v1759
        %1768 = vmatprep.subr.bf16.mxu0 0
        %1769 = vmatpush1.bf16.msra.mxu0 %v1760
        %1770 = vmatprep.subr.bf16.mxu0 0
        %1771 = vmatpush1.bf16.msra.mxu0 0
        %1772 = vmatprep.subr.bf16.mxu0 0
        %1773 = vmatpush1.bf16.msra.mxu0 0
        %1774 = vmatprep.subr.bf16.mxu0 0
        %1775 = vmatpush1.bf16.msra.mxu0 0
        %1776 = vmatprep.subr.bf16.mxu0 0
        %1777 = vmatpush1.bf16.msra.mxu0 0
        %1778 = vmatprep.subr.bf16.mxu0 0
        %1779 = vmatpush1.bf16.msra.mxu0 0
        %1780 = vmatprep.subr.bf16.mxu0 0
        %1781 = vmatpush1.bf16.msra.mxu0 0
        %1782 = vmatprep.subr.bf16.mxu0 0
        %1783 = vmatpush1.bf16.msra.mxu0 0
        %1784 = vmatprep.subr.bf16.mxu0 0
        %1785 = vmatpush1.bf16.msra.mxu0 0
        %1786 = vmatprep.subr.bf16.mxu0 0
        %1787 = vmatpush1.bf16.msra.mxu0 0
        %1788 = vmatprep.subr.bf16.mxu0 0
        %1789 = vmatpush1.bf16.msra.mxu0 0
        %1790 = vmatprep.subr.bf16.mxu0 0
        %1791 = vmatpush1.bf16.msra.mxu0 0
        %1792 = vmatprep.subr.bf16.mxu0 0
        %1793 = vmatpush1.bf16.msra.mxu0 0
        %1794 = vmatprep.subr.bf16.mxu0 0
        %1795 = vmatpush1.bf16.msra.mxu0 0
        %1796 = vmatprep.subr.bf16.mxu0 0
        %1797 = vmatpush1.bf16.msra.mxu0 0
        %1798 = vmatprep.mubr.bf16.mxu0 0
        %1799 = vmatmul.mubr.bf16.gmra.mrb[0].mxu0 %v1764
        %v1800 = vpop.f32.mrb[0].mxu0
        %v1801 = vadd.f32 0.0, %v1800
        %v1802 = vpop.f32.mrb[0].mxu0
        %v1803 = vpop.f32.mrb[0].mxu0
        %v1804 = vadd.f32 0.0, %v1803
        %v1805 = vpop.f32.mrb[0].mxu0
        %1806 = vdwg.mxu0
        %v1807 = vadd.f32 %v1688, %v1801
        %v1808 = vadd.f32 %v1689, %v1804
        %v1813 = vunpack.c.l.b16 %v1363
        %v1814 = vunpack.c.l.b16 %v1364
        %v1815 = vunpack.c.l.b16 %v1365
        %v1816 = vunpack.c.l.b16 %v1366
        %v1817 = vpack.c.b16 %v1814, %v1813
        %v1818 = vpack.c.b16 %v1816, %v1815
        %1821 = vmatprep.subr.bf16.mxu0 0
        %1822 = vmatpush1.bf16.msra.mxu0 %v1817
        %1823 = vmatprep.subr.bf16.mxu0 0
        %1824 = vmatpush1.bf16.msra.mxu0 %v1818
        %1825 = vmatprep.subr.bf16.mxu0 0
        %1826 = vmatpush1.bf16.msra.mxu0 0
        %1827 = vmatprep.subr.bf16.mxu0 0
        %1828 = vmatpush1.bf16.msra.mxu0 0
        %1829 = vmatprep.subr.bf16.mxu0 0
        %1830 = vmatpush1.bf16.msra.mxu0 0
        %1831 = vmatprep.subr.bf16.mxu0 0
        %1832 = vmatpush1.bf16.msra.mxu0 0
        %1833 = vmatprep.subr.bf16.mxu0 0
        %1834 = vmatpush1.bf16.msra.mxu0 0
        %1835 = vmatprep.subr.bf16.mxu0 0
        %1836 = vmatpush1.bf16.msra.mxu0 0
        %1837 = vmatprep.subr.bf16.mxu0 0
        %1838 = vmatpush1.bf16.msra.mxu0 0
        %1839 = vmatprep.subr.bf16.mxu0 0
        %1840 = vmatpush1.bf16.msra.mxu0 0
        %1841 = vmatprep.subr.bf16.mxu0 0
        %1842 = vmatpush1.bf16.msra.mxu0 0
        %1843 = vmatprep.subr.bf16.mxu0 0
        %1844 = vmatpush1.bf16.msra.mxu0 0
        %1845 = vmatprep.subr.bf16.mxu0 0
        %1846 = vmatpush1.bf16.msra.mxu0 0
        %1847 = vmatprep.subr.bf16.mxu0 0
        %1848 = vmatpush1.bf16.msra.mxu0 0
        %1849 = vmatprep.subr.bf16.mxu0 0
        %1850 = vmatpush1.bf16.msra.mxu0 0
        %1851 = vmatprep.subr.bf16.mxu0 0
        %1852 = vmatpush1.bf16.msra.mxu0 0
        %1853 = vmatprep.mubr.bf16.mxu0 0
        %1854 = vmatmul.mubr.bf16.gmra.mrb[0].mxu0 %v1764
        %v1855 = vpop.f32.mrb[0].mxu0
        %v1856 = vadd.f32 0.0, %v1855
        %v1857 = vpop.f32.mrb[0].mxu0
        %v1858 = vpop.f32.mrb[0].mxu0
        %v1859 = vadd.f32 0.0, %v1858
        %v1860 = vpop.f32.mrb[0].mxu0
        %1861 = vdwg.mxu0
        %v1862 = vadd.f32 %v1743, %v1856
        %v1863 = vadd.f32 %v1744, %v1859
        %v1864 = vxor.u32 %v1807, 2147483648
        %v1865 = vxor.u32 %v1808, 2147483648
        %v1866 = vmul.f32 %v1864, 1.442695
        %v1867 = vpow.pop %v1866
        %v1868 = vmul.f32 %v1865, 1.442695
        %v1869 = vpow.pop %v1868
        %v1870 = vadd.f32 %v1867, 1.0
        %v1871 = vadd.f32 %v1869, 1.0
        %v1872 = vrcp.pop %v1870
        %v1873 = vmul.f32 1.0, %v1872
        %v1874 = vrcp.pop %v1871
        %v1875 = vmul.f32 1.0, %v1874
        %v1876 = vtanh.pop %v1862
        %v1877 = vtanh.pop %v1863
        %v1878 = vmul.f32 %v1873, %v1876
        %v1879 = vmul.f32 %v1875, %v1877
        %v1880 = vpack.c.bf16 %v1879, %v1878
        %v1881 = vld [vmem:[%s1140] sm:$0xf]
        %v1882 = vld [vmem:[%s1140 + $0x4] sm:$0xf]
        %v1883 = vld [vmem:[%s1140 + $0x8] sm:$0xf]
        %v1884 = vld [vmem:[%s1140 + $0xc] sm:$0xf]
        %v1885 = vld [vmem:[%s991] sm:$0x1]
        %v1887 = vlaneseq
        %v1888 = vshrl.u32 %v1887, 7
        %v1889 = vsub.s32 0, %v1888
        %v1890 = vrot.slane %v1885, %v1889
        %v1896 = vunpack.c.l.b16 %v1881
        %v1897 = vunpack.c.l.b16 %v1882
        %v1898 = vunpack.c.l.b16 %v1883
        %v1899 = vunpack.c.l.b16 %v1884
        %v1900 = vpack.c.b16 %v1897, %v1896
        %v1901 = vpack.c.b16 %v1899, %v1898
        %v1905 = vsel %vm1386, %v1880, 0
        %1907 = vmatprep.subr.bf16.mxu0 0
        %1908 = vmatpush1.bf16.msra.mxu0 %v1900
        %1909 = vmatprep.subr.bf16.mxu0 0
        %1910 = vmatpush1.bf16.msra.mxu0 %v1901
        %1911 = vmatprep.subr.bf16.mxu0 0
        %1912 = vmatpush1.bf16.msra.mxu0 0
        %1913 = vmatprep.subr.bf16.mxu0 0
        %1914 = vmatpush1.bf16.msra.mxu0 0
        %1915 = vmatprep.subr.bf16.mxu0 0
        %1916 = vmatpush1.bf16.msra.mxu0 0
        %1917 = vmatprep.subr.bf16.mxu0 0
        %1918 = vmatpush1.bf16.msra.mxu0 0
        %1919 = vmatprep.subr.bf16.mxu0 0
        %1920 = vmatpush1.bf16.msra.mxu0 0
        %1921 = vmatprep.subr.bf16.mxu0 0
        %1922 = vmatpush1.bf16.msra.mxu0 0
        %1923 = vmatprep.subr.bf16.mxu0 0
        %1924 = vmatpush1.bf16.msra.mxu0 0
        %1925 = vmatprep.subr.bf16.mxu0 0
        %1926 = vmatpush1.bf16.msra.mxu0 0
        %1927 = vmatprep.subr.bf16.mxu0 0
        %1928 = vmatpush1.bf16.msra.mxu0 0
        %1929 = vmatprep.subr.bf16.mxu0 0
        %1930 = vmatpush1.bf16.msra.mxu0 0
        %1931 = vmatprep.subr.bf16.mxu0 0
        %1932 = vmatpush1.bf16.msra.mxu0 0
        %1933 = vmatprep.subr.bf16.mxu0 0
        %1934 = vmatpush1.bf16.msra.mxu0 0
        %1935 = vmatprep.subr.bf16.mxu0 0
        %1936 = vmatpush1.bf16.msra.mxu0 0
        %1937 = vmatprep.subr.bf16.mxu0 0
        %1938 = vmatpush1.bf16.msra.mxu0 0
        %1939 = vmatprep.mubr.bf16.mxu0 0
        %1940 = vmatmul.mubr.bf16.gmra.mrb[0].mxu0 %v1905
        %v1941 = vpop.f32.mrb[0].mxu0
        %v1942 = vadd.f32 %v1890, %v1941
        %v1943 = vpop.f32.mrb[0].mxu0
        %v1944 = vpop.f32.mrb[0].mxu0
        %v1945 = vadd.f32 %v1890, %v1944
        %v1946 = vpop.f32.mrb[0].mxu0
        %1947 = vdwg.mxu0
        %v1948 = vld [vmem:[%s983] sm:$0xf]
        %v1949 = vld [vmem:[%s983 + $0x4] sm:$0xf]
        %v1950 = vld [vmem:[%s983 + $0x8] sm:$0xf]
        %v1951 = vld [vmem:[%s983 + $0xc] sm:$0xf]
        %v1952 = vld [vmem:[%s999] sm:$0x1]
        %v1954 = vlaneseq
        %v1955 = vshrl.u32 %v1954, 7
        %v1956 = vsub.s32 0, %v1955
        %v1957 = vrot.slane %v1952, %v1956
        %v1963 = vunpack.c.l.b16 %v1948
        %v1964 = vunpack.c.l.b16 %v1949
        %v1965 = vunpack.c.l.b16 %v1950
        %v1966 = vunpack.c.l.b16 %v1951
        %v1967 = vpack.c.b16 %v1964, %v1963
        %v1968 = vpack.c.b16 %v1966, %v1965
        %1971 = vmatprep.subr.bf16.mxu0 0
        %1972 = vmatpush1.bf16.msra.mxu0 %v1967
        %1973 = vmatprep.subr.bf16.mxu0 0
        %1974 = vmatpush1.bf16.msra.mxu0 %v1968
        %1975 = vmatprep.subr.bf16.mxu0 0
        %1976 = vmatpush1.bf16.msra.mxu0 0
        %1977 = vmatprep.subr.bf16.mxu0 0
        %1978 = vmatpush1.bf16.msra.mxu0 0
        %1979 = vmatprep.subr.bf16.mxu0 0
        %1980 = vmatpush1.bf16.msra.mxu0 0
        %1981 = vmatprep.subr.bf16.mxu0 0
        %1982 = vmatpush1.bf16.msra.mxu0 0
        %1983 = vmatprep.subr.bf16.mxu0 0
        %1984 = vmatpush1.bf16.msra.mxu0 0
        %1985 = vmatprep.subr.bf16.mxu0 0
        %1986 = vmatpush1.bf16.msra.mxu0 0
        %1987 = vmatprep.subr.bf16.mxu0 0
        %1988 = vmatpush1.bf16.msra.mxu0 0
        %1989 = vmatprep.subr.bf16.mxu0 0
        %1990 = vmatpush1.bf16.msra.mxu0 0
        %1991 = vmatprep.subr.bf16.mxu0 0
        %1992 = vmatpush1.bf16.msra.mxu0 0
        %1993 = vmatprep.subr.bf16.mxu0 0
        %1994 = vmatpush1.bf16.msra.mxu0 0
        %1995 = vmatprep.subr.bf16.mxu0 0
        %1996 = vmatpush1.bf16.msra.mxu0 0
        %1997 = vmatprep.subr.bf16.mxu0 0
        %1998 = vmatpush1.bf16.msra.mxu0 0
        %1999 = vmatprep.subr.bf16.mxu0 0
        %2000 = vmatpush1.bf16.msra.mxu0 0
        %2001 = vmatprep.subr.bf16.mxu0 0
        %2002 = vmatpush1.bf16.msra.mxu0 0
        %2003 = vmatprep.mubr.bf16.mxu0 0
        %2004 = vmatmul.mubr.bf16.gmra.mrb[0].mxu0 %v1905
        %v2005 = vpop.f32.mrb[0].mxu0
        %v2006 = vadd.f32 %v1957, %v2005
        %v2007 = vpop.f32.mrb[0].mxu0
        %v2008 = vpop.f32.mrb[0].mxu0
        %v2009 = vadd.f32 %v1957, %v2008
        %v2010 = vpop.f32.mrb[0].mxu0
        %2011 = vdwg.mxu0
        %v2012 = vadd.f32 %v1318, %v1942
        %v2013 = vadd.f32 %v1319, %v1945
        %v2014 = vmul.f32 %v2012, 0.70710677
        %v2015 = vmul.f32 %v2013, 0.70710677
        %2016 = vst.msk [vmem:[#allocation2] sm:$0xff] %vm1386, %v2014
        %2017 = vst.msk [vmem:[#allocation2 + $0x8] sm:$0xff] %vm1386, %v2015
        %v2018 = vld [vmem:[#allocation3] sm:$0xff]
        %v2019 = vld [vmem:[#allocation3 + $0x8] sm:$0xff]
        %v2020 = vadd.f32 %v2018, %v2006
        %v2021 = vadd.f32 %v2019, %v2009
        %2022 = vst.msk [vmem:[#allocation3] sm:$0xff] %vm1386, %v2020
        %2023 = vst.msk [vmem:[#allocation3 + $0x8] sm:$0xff] %vm1386, %v2021
        %p2024 = scmp.eq.s32.totalorder %s59, 1
        // Predicated region
        $region161: #{tpu_custom_call.1} parent=103 // pred_check
          %p2025 = pneg %p2024
        $region162: #{tpu_custom_call.1} parent=103 // pred_check_branch
          %2027 = sbr.rel (%p2025) target = $region164
        $region163: #{tpu_custom_call.1} parent=103 // pred_region
          %v2028 = vld [vmem:[#allocation3] sm:$0xff]
          %v2029 = vld [vmem:[#allocation3 + $0x8] sm:$0xff]
          %v2030 = vmul.f32 %v2028, 0.70710677
          %v2031 = vmul.f32 %v2029, 0.70710677
          %v2032 = vpack.c.bf16 %v2031, %v2030
          %v2033 = vld [vmem:[%s17] sm:$0xf]
          %v2034 = vld [vmem:[%s17 + $0x4] sm:$0xf]
          %v2035 = vld [vmem:[%s17 + $0x8] sm:$0xf]
          %v2036 = vld [vmem:[%s17 + $0xc] sm:$0xf]
          %v2037 = vld [vmem:[%s18] sm:$0x1]
          %v2039 = vlaneseq
          %v2040 = vshrl.u32 %v2039, 7
          %v2041 = vsub.s32 0, %v2040
          %v2042 = vrot.slane %v2037, %v2041
          %v2048 = vunpack.c.l.b16 %v2033
          %v2049 = vunpack.c.l.b16 %v2034
          %v2050 = vunpack.c.l.b16 %v2035
          %v2051 = vunpack.c.l.b16 %v2036
          %v2052 = vpack.c.b16 %v2049, %v2048
          %v2053 = vpack.c.b16 %v2051, %v2050
          %v2057 = vsel %vm1386, %v2032, 0
          %2059 = vmatprep.subr.bf16.mxu0 0
          %2060 = vmatpush1.bf16.msra.mxu0 %v2052
          %2061 = vmatprep.subr.bf16.mxu0 0
          %2062 = vmatpush1.bf16.msra.mxu0 %v2053
          %2063 = vmatprep.subr.bf16.mxu0 0
          %2064 = vmatpush1.bf16.msra.mxu0 0
          %2065 = vmatprep.subr.bf16.mxu0 0
          %2066 = vmatpush1.bf16.msra.mxu0 0
          %2067 = vmatprep.subr.bf16.mxu0 0
          %2068 = vmatpush1.bf16.msra.mxu0 0
          %2069 = vmatprep.subr.bf16.mxu0 0
          %2070 = vmatpush1.bf16.msra.mxu0 0
          %2071 = vmatprep.subr.bf16.mxu0 0
          %2072 = vmatpush1.bf16.msra.mxu0 0
          %2073 = vmatprep.subr.bf16.mxu0 0
          %2074 = vmatpush1.bf16.msra.mxu0 0
          %2075 = vmatprep.subr.bf16.mxu0 0
          %2076 = vmatpush1.bf16.msra.mxu0 0
          %2077 = vmatprep.subr.bf16.mxu0 0
          %2078 = vmatpush1.bf16.msra.mxu0 0
          %2079 = vmatprep.subr.bf16.mxu0 0
          %2080 = vmatpush1.bf16.msra.mxu0 0
          %2081 = vmatprep.subr.bf16.mxu0 0
          %2082 = vmatpush1.bf16.msra.mxu0 0
          %2083 = vmatprep.subr.bf16.mxu0 0
          %2084 = vmatpush1.bf16.msra.mxu0 0
          %2085 = vmatprep.subr.bf16.mxu0 0
          %2086 = vmatpush1.bf16.msra.mxu0 0
          %2087 = vmatprep.subr.bf16.mxu0 0
          %2088 = vmatpush1.bf16.msra.mxu0 0
          %2089 = vmatprep.subr.bf16.mxu0 0
          %2090 = vmatpush1.bf16.msra.mxu0 0
          %2091 = vmatprep.mubr.bf16.mxu0 0
          %2092 = vmatmul.mubr.bf16.gmra.mrb[0].mxu0 %v2057
          %v2093 = vpop.f32.mrb[0].mxu0
          %v2094 = vadd.f32 %v2042, %v2093
          %v2095 = vpop.f32.mrb[0].mxu0
          %v2096 = vpop.f32.mrb[0].mxu0
          %v2097 = vadd.f32 %v2042, %v2096
          %v2098 = vpop.f32.mrb[0].mxu0
          %2099 = vdwg.mxu0
          %v2100 = vmax.f32 %v2094, 0.0
          %v2101 = vmax.f32 %v2097, 0.0
          %v2102 = vpack.c.bf16 %v2101, %v2100
          %v2103 = vld [vmem:[%s19] sm:$0xf]
          %v2104 = vld [vmem:[%s19 + $0x4] sm:$0xf]
          %v2105 = vld [vmem:[%s19 + $0x8] sm:$0xf]
          %v2106 = vld [vmem:[%s19 + $0xc] sm:$0xf]
          %v2107 = vld [vmem:[%s20] sm:$0x1]
          %v2109 = vlaneseq
          %v2110 = vshrl.u32 %v2109, 7
          %v2111 = vsub.s32 0, %v2110
          %v2112 = vrot.slane %v2107, %v2111
          %v2118 = vunpack.c.l.b16 %v2103
          %v2119 = vunpack.c.l.b16 %v2104
          %v2120 = vunpack.c.l.b16 %v2105
          %v2121 = vunpack.c.l.b16 %v2106
          %v2122 = vpack.c.b16 %v2119, %v2118
          %v2123 = vpack.c.b16 %v2121, %v2120
          %v2127 = vsel %vm1386, %v2102, 0
          %2129 = vmatprep.subr.bf16.mxu0 0
          %2130 = vmatpush1.bf16.msra.mxu0 %v2122
          %2131 = vmatprep.subr.bf16.mxu0 0
          %2132 = vmatpush1.bf16.msra.mxu0 %v2123
          %2133 = vmatprep.subr.bf16.mxu0 0
          %2134 = vmatpush1.bf16.msra.mxu0 0
          %2135 = vmatprep.subr.bf16.mxu0 0
          %2136 = vmatpush1.bf16.msra.mxu0 0
          %2137 = vmatprep.subr.bf16.mxu0 0
          %2138 = vmatpush1.bf16.msra.mxu0 0
          %2139 = vmatprep.subr.bf16.mxu0 0
          %2140 = vmatpush1.bf16.msra.mxu0 0
          %2141 = vmatprep.subr.bf16.mxu0 0
          %2142 = vmatpush1.bf16.msra.mxu0 0
          %2143 = vmatprep.subr.bf16.mxu0 0
          %2144 = vmatpush1.bf16.msra.mxu0 0
          %2145 = vmatprep.subr.bf16.mxu0 0
          %2146 = vmatpush1.bf16.msra.mxu0 0
          %2147 = vmatprep.subr.bf16.mxu0 0
          %2148 = vmatpush1.bf16.msra.mxu0 0
          %2149 = vmatprep.subr.bf16.mxu0 0
          %2150 = vmatpush1.bf16.msra.mxu0 0
          %2151 = vmatprep.subr.bf16.mxu0 0
          %2152 = vmatpush1.bf16.msra.mxu0 0
          %2153 = vmatprep.subr.bf16.mxu0 0
          %2154 = vmatpush1.bf16.msra.mxu0 0
          %2155 = vmatprep.subr.bf16.mxu0 0
          %2156 = vmatpush1.bf16.msra.mxu0 0
          %2157 = vmatprep.subr.bf16.mxu0 0
          %2158 = vmatpush1.bf16.msra.mxu0 0
          %2159 = vmatprep.subr.bf16.mxu0 0
          %2160 = vmatpush1.bf16.msra.mxu0 0
          %2161 = vmatprep.mubr.bf16.mxu0 0
          %2162 = vmatmul.mubr.bf16.gmra.mrb[0].mxu0 %v2127
          %v2163 = vpop.f32.mrb[0].mxu0
          %v2164 = vadd.f32 %v2112, %v2163
          %v2165 = vpop.f32.mrb[0].mxu0
          %v2166 = vpop.f32.mrb[0].mxu0
          %v2167 = vadd.f32 %v2112, %v2166
          %v2168 = vpop.f32.mrb[0].mxu0
          %2169 = vdwg.mxu0
          %2170 = vxpose.xlu0.b32.start [1/16] %v2164, 128
          %2171 = vxpose.xlu0.b32.cont [2/16] %v2167, 128
          %2172 = vxpose.xlu0.b32.cont [3/16] 0.0, 128
          %2173 = vxpose.xlu0.b32.cont [4/16] 0.0, 128
          %2174 = vxpose.xlu0.b32.cont [5/16] 0.0, 128
          %2175 = vxpose.xlu0.b32.cont [6/16] 0.0, 128
          %2176 = vxpose.xlu0.b32.cont [7/16] 0.0, 128
          %2177 = vxpose.xlu0.b32.cont [8/16] 0.0, 128
          %2178 = vxpose.xlu0.b32.cont [9/16] 0.0, 128
          %2179 = vxpose.xlu0.b32.cont [10/16] 0.0, 128
          %2180 = vxpose.xlu0.b32.cont [11/16] 0.0, 128
          %2181 = vxpose.xlu0.b32.cont [12/16] 0.0, 128
          %2182 = vxpose.xlu0.b32.cont [13/16] 0.0, 128
          %2183 = vxpose.xlu0.b32.cont [14/16] 0.0, 128
          %2184 = vxpose.xlu0.b32.cont [15/16] 0.0, 128
          %2185 = vxpose.xlu0.b32.end [16/16] 0.0, 128
          %v2186 = vpop.trf.xlu0
          %v2187 = vpop.trf.xlu0
          %v2188 = vpop.trf.xlu0
          %v2189 = vpop.trf.xlu0
          %v2190 = vpop.trf.xlu0
          %v2191 = vpop.trf.xlu0
          %v2192 = vpop.trf.xlu0
          %v2193 = vpop.trf.xlu0
          %v2194 = vpop.trf.xlu0
          %v2195 = vpop.trf.xlu0
          %v2196 = vpop.trf.xlu0
          %v2197 = vpop.trf.xlu0
          %v2198 = vpop.trf.xlu0
          %v2199 = vpop.trf.xlu0
          %v2200 = vpop.trf.xlu0
          %v2201 = vpop.trf.xlu0
          %vm2202 = vcmask 130048
          %2203 = vst.msk [vmem:[%s1120] sm:$0xff] %vm2202, %v2186
          %2204 = vst.msk [vmem:[%s1120 + $0x8] sm:$0xff] %vm2202, %v2187
        $region164: #{tpu_custom_call.1} parent=103 // pred_fallthru
          _
        %s2205 = sand.u32 %s592, 1
        %s2206 = scalar_lea.sflag [#allocation7], %s2205
        %s2207 = sand.u32 %s592, 1
        %s2208 = smul.addr %s2207, 16
        %s2209 = scalar_lea.vmem [#allocation26], %s2208
        // Predicated region
        $region165: #{tpu_custom_call.1} parent=103 // pred_check
          %p2210 = pneg %p602
        $region166: #{tpu_custom_call.1} parent=103 // pred_check_branch
          %2212 = sbr.rel (%p2210) target = $region168
        $region167: #{tpu_custom_call.1} parent=103 // pred_region
          %s2214 = ssub.s32 256, 256
          %2215 = vsyncadd %s2206, %s2214
          %s2216 = smul.addr %s58, 2
          %s2217 = smul.addr %s2216, 128
          %s2218 = scalar_lea.hbm %s21, %s2217
          %s2219 = sshll.u32 %s2209, 4
          %s2220 = int_to_ptr.vmem [resolvable:$true] %s2219
          %2225 = dma.vmem_to_hbm [thread:$0]  %s2220, 256, %s2218, %s2206, 128, 128, 8
        $region168: #{tpu_custom_call.1} parent=103 // pred_fallthru
          _
      $region104: #{tpu_custom_call.1} parent=5 // pred_fallthru
        _
      %p2226 = scmp.le.s32.totalorder 2, %s49
      // Predicated region
      $region169: #{tpu_custom_call.1} parent=5 // pred_check
        %p2227 = pneg %p2226
      $region170: #{tpu_custom_call.1} parent=5 // pred_check_branch
        %2229 = sbr.rel (%p2227) target = $region172
      $region171: #{tpu_custom_call.1} parent=5 // pred_region
        %s2230 = ssub.s32 %s49, 2
        // Predicated region
        $region173: #{tpu_custom_call.1} parent=171 // pred_check
          %p2231 = pneg %p608
        $region174: #{tpu_custom_call.1} parent=171 // pred_check_branch
          %2233 = sbr.rel (%p2231) target = $region176
        $region175: #{tpu_custom_call.1} parent=171 // pred_region
          %s2234 = sand.u32 %s593, 1
          %s2235 = scalar_lea.sflag [#allocation7], %s2234
          %s2236 = sand.u32 %s593, 1
          %s2237 = smul.addr %s2236, 16
          %s2238 = scalar_lea.vmem [#allocation26], %s2237
          %2239 = dma.done %s2235, 256
        $region176: #{tpu_custom_call.1} parent=171 // pred_fallthru
          _
      $region172: #{tpu_custom_call.1} parent=5 // pred_fallthru
        _
    $region6: #{tpu_custom_call.1} parent=1 // loop_footer
      %s53 = sadd.s32 1, %s49
    $region7: #{tpu_custom_call.1} parent=1 // loop_footer_branch
      %48 = sbr.rel target = $region3
    $region8: #{tpu_custom_call.1} parent=1 // loop_exit
      _
    %2240 = vsyncpa [#allocation6], 1
    %s2241 = scalar_lea.sflag [#allocation6], 1
    %2242 = vsyncpa %s2241, 1
    %2243 = vsyncpa [#allocation9], 1
    %2244 = vsyncpa [#allocation12], 1
    %s2245 = scalar_lea.sflag [#allocation12], 1
    %2246 = vsyncpa %s2245, 1
    %2247 = vsyncpa [#allocation15], 1
    %s2248 = scalar_lea.sflag [#allocation15], 1
    %2249 = vsyncpa %s2248, 1
    %2250 = vsyncpa [#allocation18], 1
    %s2251 = scalar_lea.sflag [#allocation18], 1
    %2252 = vsyncpa %s2251, 1
    %2253 = vsyncpa [#allocation21], 1
    %s2254 = scalar_lea.sflag [#allocation21], 1
    %2255 = vsyncpa %s2254, 1
    %2256 = vsyncpa [#allocation24], 1
    %s2257 = scalar_lea.sflag [#allocation24], 1
    %2258 = vsyncpa %s2257, 1
    %2259 = vsyncpa [#allocation7], 1
    %s2260 = scalar_lea.sflag [#allocation7], 1
    %2261 = vsyncpa %s2260, 1

</llo_original>
